<compile_context>
chip_gen: v6e
topology: v6e:2x2x1
jax: 0.10.0
libtpu: 0.0.40
codegen_flags: <defaults>
</compile_context>

<pallas_src>
import functools

import jax
import jax.numpy as jnp
from jax import lax
from jax.experimental import pallas as pl
from jax.experimental.pallas import tpu as pltpu

EPS = 1e-12


# ---------------------------------------------------------------------------
# In-kernel helper: circular shift along the lane (last) dimension.
#   y[:, p] = x[:, (p + off) % L]   for a static integer `off`.
# Implemented with static slices + concat so the semantics do not depend on
# any hardware rotate-direction convention; Mosaic lowers it to lane
# rotates/selects (XLU work, off the VALU slot).
# ---------------------------------------------------------------------------
def _lane_shift(x, off):
    L = x.shape[-1]
    k = off % L
    if k == 0:
        return x
    return jnp.concatenate([x[:, k:], x[:, :k]], axis=-1)


# ---------------------------------------------------------------------------
# Fused kernel: the whole StackedResidualBlock2d forward for one image.
#   x_ref  : (1, C, HW)  f32    input image, channels-major (NCHW flattened)
#   w1_ref : (S, Cb, C)  bf16   folded 1x1-in weights  (per stacked block)
#   b1_ref : (S, Cb, 1)  f32    folded 1x1-in bias
#   w2_ref : (S, KT, Cb, Cb) bf16  folded KhxKw weights, tap-major (ky,kx)
#   b2_ref : (S, Cb, 1)  f32
#   w3_ref : (S, C, Cb)  bf16   folded 1x1-out weights
#   b3_ref : (S, C, 1)   f32
#   m_ref  : (KT, HW)    f32    0/1 boundary masks per tap
#   o_ref  : (1, C, HW)  f32
# ---------------------------------------------------------------------------
def _make_stacked_kernel(num_stacks, offsets):
    def kernel(x_ref, w1_ref, b1_ref, w2_ref, b2_ref, w3_ref, b3_ref,
               m_ref, o_ref):
        xt = x_ref[0]                                         # (C, HW) f32
        for s in range(num_stacks):                           # unrolled
            # --- 1x1 bottleneck-in conv (+ folded BN) + ReLU ---------------
            h1 = jnp.dot(w1_ref[s], xt.astype(jnp.bfloat16),
                         preferred_element_type=jnp.float32)
            h1 = jnp.maximum(h1 + b1_ref[s], 0.0)             # (Cb, HW) f32

            # --- KhxKw 'same' conv: accumulated shifted matmuls (+BN, ReLU) -
            acc = None
            for k, off in enumerate(offsets):
                src = _lane_shift(h1, off)
                if off != 0:                                   # boundary mask
                    src = src * m_ref[k:k + 1, :]
                t = jnp.dot(w2_ref[s, k], src.astype(jnp.bfloat16),
                            preferred_element_type=jnp.float32)
                acc = t if acc is None else acc + t
            h2 = jnp.maximum(acc + b2_ref[s], 0.0)            # (Cb, HW) f32

            # --- 1x1 bottleneck-out conv (+ folded BN) + identity skip -----
            y = jnp.dot(w3_ref[s], h2.astype(jnp.bfloat16),
                        preferred_element_type=jnp.float32)
            xt = y + b3_ref[s] + xt                           # (C, HW) f32
        o_ref[0] = xt.astype(o_ref.dtype)

    return kernel


# ---------------------------------------------------------------------------
# Wrapper: one pallas_call for the whole stacked block, grid over batch.
# ---------------------------------------------------------------------------
def stacked_residual_forward(x_nchw, packed_params, masks, *, offsets):
    w1, b1, w2, b2, w3, b3 = packed_params
    N, C, H, W = x_nchw.shape
    HW = H * W
    num_stacks = w1.shape[0]
    x3 = x_nchw.reshape(N, C, HW)          # NCHW flattened == (C, HW) / image

    def full_spec(a):
        return pl.BlockSpec(a.shape, lambda n, _nd=a.ndim: (0,) * _nd)

    out = pl.pallas_call(
        _make_stacked_kernel(num_stacks, offsets),
        out_shape=jax.ShapeDtypeStruct((N, C, HW), jnp.float32),
        grid_spec=pltpu.PrefetchScalarGridSpec(
            num_scalar_prefetch=0,
            grid=(N,),                                   # one image per step
            in_specs=[
                pl.BlockSpec((1, C, HW), lambda n: (n, 0, 0)),
                full_spec(w1), full_spec(b1),
                full_spec(w2), full_spec(b2),
                full_spec(w3), full_spec(b3),
                full_spec(masks),
            ],
            out_specs=pl.BlockSpec((1, C, HW), lambda n: (n, 0, 0)),
        ),
        compiler_params=pltpu.CompilerParams(
            dimension_semantics=("parallel",),           # megacore on v7x
            vmem_limit_bytes=32 * 1024 * 1024,           # explicit, v7x-safe
        ),
    )(x3, w1, b1, w2, b2, w3, b3, masks)
    return out.reshape(N, C, H, W)


# ---------------------------------------------------------------------------
# Host-side preprocessing: taps/masks + BN folding + per-stack packing
# ---------------------------------------------------------------------------
def make_taps(H, W, kh, kw):
    """Lane offsets and 0/1 validity masks for a kh x kw 'same' conv applied
    to an image flattened row-major onto a length-H*W lane vector."""
    assert kh % 2 == 1 and kw % 2 == 1, "odd kernel sizes assumed"
    HW = H * W
    yy = jnp.arange(HW, dtype=jnp.int32) // W
    xx = jnp.arange(HW, dtype=jnp.int32) % W
    offsets, masks = [], []
    for dy in range(-(kh // 2), kh // 2 + 1):
        for dx in range(-(kw // 2), kw // 2 + 1):
            offsets.append(dy * W + dx)
            valid = ((yy + dy >= 0) & (yy + dy < H) &
                     (xx + dx >= 0) & (xx + dx < W))
            masks.append(valid.astype(jnp.float32))
    return tuple(offsets), jnp.stack(masks)               # (kh*kw, HW)


def fold_block_params(p, eps=EPS):
    """Fold inference BatchNorm (+ conv bias) into the conv weights.
    Weights stay in the torch (C_out, C_in[, KH, KW]) layout, which is exactly
    the LHS needed by the transposed (channels, pixels) matmuls."""
    def fold(w, b, bn):
        gamma, beta, mean, var = bn
        scale = gamma * lax.rsqrt(var + eps)               # (C_out,)
        w_eff = w * scale.reshape((-1,) + (1,) * (w.ndim - 1))
        b_eff = (b - mean) * scale + beta
        return w_eff, b_eff

    w1, b1 = fold(p["w1"], p["b1"], p["bn1"])              # (Cb, Cin)
    w2, b2 = fold(p["w2"], p["b2"], p["bn2"])              # (Cb, Cb, KH, KW)
    w3, b3 = fold(p["w3"], p["b3"], p["bn3"])              # (Cout, Cb)
    kh, kw = w2.shape[2], w2.shape[3]
    w2 = jnp.transpose(w2, (2, 3, 0, 1)).reshape(kh * kw, w2.shape[0],
                                                 w2.shape[1])
    return (w1.astype(jnp.bfloat16), b1.reshape(-1, 1),
            w2.astype(jnp.bfloat16), b2.reshape(-1, 1),
            w3.astype(jnp.bfloat16), b3.reshape(-1, 1))


def pack_stacked_params(params, eps=EPS):
    folded = [fold_block_params(p, eps) for p in params]
    return tuple(jnp.stack([f[i] for f in folded]) for i in range(6))


# ---------------------------------------------------------------------------
# Independent plain-JAX/XLA reference (unfolded BN, NCHW) for verification
# ---------------------------------------------------------------------------
def _bn_ref(x, bn, eps=EPS):
    gamma, beta, mean, var = bn
    r = lambda v: v.reshape(1, -1, 1, 1)
    return (x - r(mean)) * r(gamma) * lax.rsqrt(r(var) + eps) + r(beta)


def residual_block_ref(x, p, eps=EPS):
    h = jnp.einsum("nchw,dc->ndhw", x, p["w1"]) + p["b1"].reshape(1, -1, 1, 1)
    h = jax.nn.relu(_bn_ref(h, p["bn1"], eps))
    h = lax.conv_general_dilated(h, p["w2"], (1, 1), "SAME",
                                 dimension_numbers=("NCHW", "OIHW", "NCHW"))
    h = h + p["b2"].reshape(1, -1, 1, 1)
    h = jax.nn.relu(_bn_ref(h, p["bn2"], eps))
    h = jnp.einsum("nchw,dc->ndhw", h, p["w3"]) + p["b3"].reshape(1, -1, 1, 1)
    return _bn_ref(h, p["bn3"], eps) + x


def stacked_ref(x, params, eps=EPS):
    for p in params:
        x = residual_block_ref(x, p, eps)
    return x


# ---------------------------------------------------------------------------
# Deterministic parameter initialization (torch weight layouts)
# ---------------------------------------------------------------------------
def _init_bn(key, c):
    k1, k2, k3, k4 = jax.random.split(key, 4)
    gamma = 1.0 + 0.1 * jax.random.normal(k1, (c,), jnp.float32)
    beta = 0.1 * jax.random.normal(k2, (c,), jnp.float32)
    mean = 0.1 * jax.random.normal(k3, (c,), jnp.float32)
    var = jax.random.uniform(k4, (c,), jnp.float32, 0.5, 1.5)
    return (gamma, beta, mean, var)


def init_residual_block(key, cin, cout, cb, kh, kw):
    ks = jax.random.split(key, 9)
    s = 0.1
    return {
        "w1": s * jax.random.normal(ks[0], (cb, cin), jnp.float32),
        "b1": s * jax.random.normal(ks[1], (cb,), jnp.float32),
        "bn1": _init_bn(ks[2], cb),
        "w2": s * jax.random.normal(ks[3], (cb, cb, kh, kw), jnp.float32),
        "b2": s * jax.random.normal(ks[4], (cb,), jnp.float32),
        "bn2": _init_bn(ks[5], cb),
        "w3": s * jax.random.normal(ks[6], (cout, cb), jnp.float32),
        "b3": s * jax.random.normal(ks[7], (cout,), jnp.float32),
        "bn3": _init_bn(ks[8], cout),
    }


if __name__ == "__main__":
    # Small, module-consistent shapes.
    N, C_in, C_out, C_b, H, W = 2, 8, 8, 4, 16, 16
    kh, kw = 3, 3                 # kernel_size=(3, 3)
    num_stacks = 2

    key = jax.random.PRNGKey(0)
    k_x, k_p = jax.random.split(key)
    x = jax.random.normal(k_x, (N, C_in, H, W), jnp.float32)   # NCHW input

    assert C_in == C_out, "identity residual requires in_channels == out_channels"
    block_keys = jax.random.split(k_p, num_stacks)
    params = [init_residual_block(block_keys[i], C_in if i == 0 else C_out,
                                  C_out, C_b, kh, kw)
              for i in range(num_stacks)]

    offsets, masks = make_taps(H, W, kh, kw)
    packed = pack_stacked_params(params)

    fwd = jax.jit(functools.partial(stacked_residual_forward, offsets=offsets))
    out = fwd(x, packed, masks)
    jax.block_until_ready(out)
    assert out.shape == (N, C_out, H, W) and out.dtype == jnp.float32

    # Cross-check against an independent plain-JAX/XLA reference
    # (bf16 MXU operands in the kernel -> modest tolerance).
    ref = stacked_ref(x, params)
    err = float(jnp.max(jnp.abs(out - ref)))
    assert err < 5e-2, f"kernel/reference mismatch: max abs err = {err}"
    print("KERNEL_OK")
</pallas_src>

<mosaic_0001>
module attributes {stable_mosaic.version = 11 : i64} {
  func.func @kernel(%arg0: i32, %arg1: memref<1x8x256xf32, #tpu.memory_space<vmem>>, %arg2: memref<2x4x8xbf16, #tpu.memory_space<vmem>>, %arg3: memref<2x4x1xf32, #tpu.memory_space<vmem>>, %arg4: memref<2x9x4x4xbf16, #tpu.memory_space<vmem>>, %arg5: memref<2x4x1xf32, #tpu.memory_space<vmem>>, %arg6: memref<2x8x4xbf16, #tpu.memory_space<vmem>>, %arg7: memref<2x8x1xf32, #tpu.memory_space<vmem>>, %arg8: memref<9x256xf32, #tpu.memory_space<vmem>>, %arg9: memref<1x8x256xf32, #tpu.memory_space<vmem>>) attributes {dimension_semantics = [#tpu.dimension_semantics<parallel>], iteration_bounds = array<i64: 2>, scalar_prefetch = 0 : i64, scratch_operands = 0 : i64, tpu.core_type = #tpu.core_type<tc>, window_params = [{transform_indices = @transform_0, window_bounds = array<i64: 1, 8, 256>}, {pipeline_mode = #tpu.pipeline_mode<synchronous>, transform_indices = @transform_1, window_bounds = array<i64: 2, 4, 8>}, {pipeline_mode = #tpu.pipeline_mode<synchronous>, transform_indices = @transform_2, window_bounds = array<i64: 2, 4, 1>}, {pipeline_mode = #tpu.pipeline_mode<synchronous>, transform_indices = @transform_3, window_bounds = array<i64: 2, 9, 4, 4>}, {pipeline_mode = #tpu.pipeline_mode<synchronous>, transform_indices = @transform_4, window_bounds = array<i64: 2, 4, 1>}, {pipeline_mode = #tpu.pipeline_mode<synchronous>, transform_indices = @transform_5, window_bounds = array<i64: 2, 8, 4>}, {pipeline_mode = #tpu.pipeline_mode<synchronous>, transform_indices = @transform_6, window_bounds = array<i64: 2, 8, 1>}, {pipeline_mode = #tpu.pipeline_mode<synchronous>, transform_indices = @transform_7, window_bounds = array<i64: 9, 256>}, {transform_indices = @transform_8, window_bounds = array<i64: 1, 8, 256>}]} {
    %c0 = arith.constant 0 : index
    %c0_0 = arith.constant 0 : index
    %c0_1 = arith.constant 0 : index
    %0 = vector.load %arg1[%c0, %c0_0, %c0_1] : memref<1x8x256xf32, #tpu.memory_space<vmem>>, vector<1x8x256xf32>
    %1 = vector.shape_cast %0 : vector<1x8x256xf32> to vector<8x256xf32>
    %c0_2 = arith.constant 0 : index
    %c0_3 = arith.constant 0 : index
    %c0_4 = arith.constant 0 : index
    %2 = vector.load %arg2[%c0_2, %c0_3, %c0_4] : memref<2x4x8xbf16, #tpu.memory_space<vmem>>, vector<1x4x8xbf16>
    %3 = vector.shape_cast %2 : vector<1x4x8xbf16> to vector<4x8xbf16>
    %4 = arith.truncf %1 : vector<8x256xf32> to vector<8x256xbf16>
    %cst = arith.constant dense<0.000000e+00> : vector<4x256xf32>
    %5 = tpu.matmul %3, %4, %cst {dimension_numbers = #tpu.dot_dimension_numbers<[1], [0], [0], [1], [0, 0, 1, 1], [], []>} : vector<4x8xbf16>, vector<8x256xbf16>, vector<4x256xf32> -> vector<4x256xf32>
    %c0_5 = arith.constant 0 : index
    %c0_6 = arith.constant 0 : index
    %c0_7 = arith.constant 0 : index
    %6 = vector.load %arg3[%c0_5, %c0_6, %c0_7] : memref<2x4x1xf32, #tpu.memory_space<vmem>>, vector<1x4x1xf32>
    %7 = vector.shape_cast %6 : vector<1x4x1xf32> to vector<4x1xf32>
    %8 = vector.broadcast %7 : vector<4x1xf32> to vector<4x256xf32>
    %9 = arith.addf %5, %8 : vector<4x256xf32>
    %cst_8 = arith.constant 0.000000e+00 : f32
    %10 = vector.broadcast %cst_8 : f32 to vector<4x256xf32>
    %11 = arith.maximumf %9, %10 : vector<4x256xf32>
    %12 = vector.extract_strided_slice %11 {offsets = [0, 239], sizes = [4, 17], strides = [1, 1]} : vector<4x256xf32> to vector<4x17xf32>
    %13 = vector.extract_strided_slice %11 {offsets = [0, 0], sizes = [4, 239], strides = [1, 1]} : vector<4x256xf32> to vector<4x239xf32>
    %14 = tpu.concatenate %12, %13 in 1 : vector<4x17xf32>, vector<4x239xf32> -> vector<4x256xf32>
    %c0_9 = arith.constant 0 : index
    %c0_10 = arith.constant 0 : index
    %15 = vector.load %arg8[%c0_9, %c0_10] : memref<9x256xf32, #tpu.memory_space<vmem>>, vector<1x256xf32>
    %16 = vector.broadcast %15 : vector<1x256xf32> to vector<4x256xf32>
    %17 = arith.mulf %14, %16 : vector<4x256xf32>
    %c0_11 = arith.constant 0 : index
    %c0_12 = arith.constant 0 : index
    %c0_13 = arith.constant 0 : index
    %c0_14 = arith.constant 0 : index
    %18 = vector.load %arg4[%c0_11, %c0_12, %c0_13, %c0_14] : memref<2x9x4x4xbf16, #tpu.memory_space<vmem>>, vector<1x1x4x4xbf16>
    %19 = vector.shape_cast %18 : vector<1x1x4x4xbf16> to vector<4x4xbf16>
    %20 = arith.truncf %17 : vector<4x256xf32> to vector<4x256xbf16>
    %cst_15 = arith.constant dense<0.000000e+00> : vector<4x256xf32>
    %21 = tpu.matmul %19, %20, %cst_15 {dimension_numbers = #tpu.dot_dimension_numbers<[1], [0], [0], [1], [0, 0, 1, 1], [], []>} : vector<4x4xbf16>, vector<4x256xbf16>, vector<4x256xf32> -> vector<4x256xf32>
    %22 = vector.extract_strided_slice %11 {offsets = [0, 240], sizes = [4, 16], strides = [1, 1]} : vector<4x256xf32> to vector<4x16xf32>
    %23 = vector.extract_strided_slice %11 {offsets = [0, 0], sizes = [4, 240], strides = [1, 1]} : vector<4x256xf32> to vector<4x240xf32>
    %24 = tpu.concatenate %22, %23 in 1 : vector<4x16xf32>, vector<4x240xf32> -> vector<4x256xf32>
    %c1 = arith.constant 1 : index
    %c0_16 = arith.constant 0 : index
    %25 = vector.load %arg8[%c1, %c0_16] : memref<9x256xf32, #tpu.memory_space<vmem>>, vector<1x256xf32>
    %26 = vector.broadcast %25 : vector<1x256xf32> to vector<4x256xf32>
    %27 = arith.mulf %24, %26 : vector<4x256xf32>
    %c0_17 = arith.constant 0 : index
    %c1_18 = arith.constant 1 : index
    %c0_19 = arith.constant 0 : index
    %c0_20 = arith.constant 0 : index
    %28 = vector.load %arg4[%c0_17, %c1_18, %c0_19, %c0_20] : memref<2x9x4x4xbf16, #tpu.memory_space<vmem>>, vector<1x1x4x4xbf16>
    %29 = vector.shape_cast %28 : vector<1x1x4x4xbf16> to vector<4x4xbf16>
    %30 = arith.truncf %27 : vector<4x256xf32> to vector<4x256xbf16>
    %cst_21 = arith.constant dense<0.000000e+00> : vector<4x256xf32>
    %31 = tpu.matmul %29, %30, %cst_21 {dimension_numbers = #tpu.dot_dimension_numbers<[1], [0], [0], [1], [0, 0, 1, 1], [], []>} : vector<4x4xbf16>, vector<4x256xbf16>, vector<4x256xf32> -> vector<4x256xf32>
    %32 = arith.addf %21, %31 : vector<4x256xf32>
    %33 = vector.extract_strided_slice %11 {offsets = [0, 241], sizes = [4, 15], strides = [1, 1]} : vector<4x256xf32> to vector<4x15xf32>
    %34 = vector.extract_strided_slice %11 {offsets = [0, 0], sizes = [4, 241], strides = [1, 1]} : vector<4x256xf32> to vector<4x241xf32>
    %35 = tpu.concatenate %33, %34 in 1 : vector<4x15xf32>, vector<4x241xf32> -> vector<4x256xf32>
    %c2 = arith.constant 2 : index
    %c0_22 = arith.constant 0 : index
    %36 = vector.load %arg8[%c2, %c0_22] : memref<9x256xf32, #tpu.memory_space<vmem>>, vector<1x256xf32>
    %37 = vector.broadcast %36 : vector<1x256xf32> to vector<4x256xf32>
    %38 = arith.mulf %35, %37 : vector<4x256xf32>
    %c0_23 = arith.constant 0 : index
    %c2_24 = arith.constant 2 : index
    %c0_25 = arith.constant 0 : index
    %c0_26 = arith.constant 0 : index
    %39 = vector.load %arg4[%c0_23, %c2_24, %c0_25, %c0_26] : memref<2x9x4x4xbf16, #tpu.memory_space<vmem>>, vector<1x1x4x4xbf16>
    %40 = vector.shape_cast %39 : vector<1x1x4x4xbf16> to vector<4x4xbf16>
    %41 = arith.truncf %38 : vector<4x256xf32> to vector<4x256xbf16>
    %cst_27 = arith.constant dense<0.000000e+00> : vector<4x256xf32>
    %42 = tpu.matmul %40, %41, %cst_27 {dimension_numbers = #tpu.dot_dimension_numbers<[1], [0], [0], [1], [0, 0, 1, 1], [], []>} : vector<4x4xbf16>, vector<4x256xbf16>, vector<4x256xf32> -> vector<4x256xf32>
    %43 = arith.addf %32, %42 : vector<4x256xf32>
    %44 = vector.extract_strided_slice %11 {offsets = [0, 255], sizes = [4, 1], strides = [1, 1]} : vector<4x256xf32> to vector<4x1xf32>
    %45 = vector.extract_strided_slice %11 {offsets = [0, 0], sizes = [4, 255], strides = [1, 1]} : vector<4x256xf32> to vector<4x255xf32>
    %46 = tpu.concatenate %44, %45 in 1 : vector<4x1xf32>, vector<4x255xf32> -> vector<4x256xf32>
    %c3 = arith.constant 3 : index
    %c0_28 = arith.constant 0 : index
    %47 = vector.load %arg8[%c3, %c0_28] : memref<9x256xf32, #tpu.memory_space<vmem>>, vector<1x256xf32>
    %48 = vector.broadcast %47 : vector<1x256xf32> to vector<4x256xf32>
    %49 = arith.mulf %46, %48 : vector<4x256xf32>
    %c0_29 = arith.constant 0 : index
    %c3_30 = arith.constant 3 : index
    %c0_31 = arith.constant 0 : index
    %c0_32 = arith.constant 0 : index
    %50 = vector.load %arg4[%c0_29, %c3_30, %c0_31, %c0_32] : memref<2x9x4x4xbf16, #tpu.memory_space<vmem>>, vector<1x1x4x4xbf16>
    %51 = vector.shape_cast %50 : vector<1x1x4x4xbf16> to vector<4x4xbf16>
    %52 = arith.truncf %49 : vector<4x256xf32> to vector<4x256xbf16>
    %cst_33 = arith.constant dense<0.000000e+00> : vector<4x256xf32>
    %53 = tpu.matmul %51, %52, %cst_33 {dimension_numbers = #tpu.dot_dimension_numbers<[1], [0], [0], [1], [0, 0, 1, 1], [], []>} : vector<4x4xbf16>, vector<4x256xbf16>, vector<4x256xf32> -> vector<4x256xf32>
    %54 = arith.addf %43, %53 : vector<4x256xf32>
    %c0_34 = arith.constant 0 : index
    %c4 = arith.constant 4 : index
    %c0_35 = arith.constant 0 : index
    %c0_36 = arith.constant 0 : index
    %55 = vector.load %arg4[%c0_34, %c4, %c0_35, %c0_36] : memref<2x9x4x4xbf16, #tpu.memory_space<vmem>>, vector<1x1x4x4xbf16>
    %56 = vector.shape_cast %55 : vector<1x1x4x4xbf16> to vector<4x4xbf16>
    %57 = arith.truncf %11 : vector<4x256xf32> to vector<4x256xbf16>
    %cst_37 = arith.constant dense<0.000000e+00> : vector<4x256xf32>
    %58 = tpu.matmul %56, %57, %cst_37 {dimension_numbers = #tpu.dot_dimension_numbers<[1], [0], [0], [1], [0, 0, 1, 1], [], []>} : vector<4x4xbf16>, vector<4x256xbf16>, vector<4x256xf32> -> vector<4x256xf32>
    %59 = arith.addf %54, %58 : vector<4x256xf32>
    %60 = vector.extract_strided_slice %11 {offsets = [0, 1], sizes = [4, 255], strides = [1, 1]} : vector<4x256xf32> to vector<4x255xf32>
    %61 = vector.extract_strided_slice %11 {offsets = [0, 0], sizes = [4, 1], strides = [1, 1]} : vector<4x256xf32> to vector<4x1xf32>
    %62 = tpu.concatenate %60, %61 in 1 : vector<4x255xf32>, vector<4x1xf32> -> vector<4x256xf32>
    %c5 = arith.constant 5 : index
    %c0_38 = arith.constant 0 : index
    %63 = vector.load %arg8[%c5, %c0_38] : memref<9x256xf32, #tpu.memory_space<vmem>>, vector<1x256xf32>
    %64 = vector.broadcast %63 : vector<1x256xf32> to vector<4x256xf32>
    %65 = arith.mulf %62, %64 : vector<4x256xf32>
    %c0_39 = arith.constant 0 : index
    %c5_40 = arith.constant 5 : index
    %c0_41 = arith.constant 0 : index
    %c0_42 = arith.constant 0 : index
    %66 = vector.load %arg4[%c0_39, %c5_40, %c0_41, %c0_42] : memref<2x9x4x4xbf16, #tpu.memory_space<vmem>>, vector<1x1x4x4xbf16>
    %67 = vector.shape_cast %66 : vector<1x1x4x4xbf16> to vector<4x4xbf16>
    %68 = arith.truncf %65 : vector<4x256xf32> to vector<4x256xbf16>
    %cst_43 = arith.constant dense<0.000000e+00> : vector<4x256xf32>
    %69 = tpu.matmul %67, %68, %cst_43 {dimension_numbers = #tpu.dot_dimension_numbers<[1], [0], [0], [1], [0, 0, 1, 1], [], []>} : vector<4x4xbf16>, vector<4x256xbf16>, vector<4x256xf32> -> vector<4x256xf32>
    %70 = arith.addf %59, %69 : vector<4x256xf32>
    %71 = vector.extract_strided_slice %11 {offsets = [0, 15], sizes = [4, 241], strides = [1, 1]} : vector<4x256xf32> to vector<4x241xf32>
    %72 = vector.extract_strided_slice %11 {offsets = [0, 0], sizes = [4, 15], strides = [1, 1]} : vector<4x256xf32> to vector<4x15xf32>
    %73 = tpu.concatenate %71, %72 in 1 : vector<4x241xf32>, vector<4x15xf32> -> vector<4x256xf32>
    %c6 = arith.constant 6 : index
    %c0_44 = arith.constant 0 : index
    %74 = vector.load %arg8[%c6, %c0_44] : memref<9x256xf32, #tpu.memory_space<vmem>>, vector<1x256xf32>
    %75 = vector.broadcast %74 : vector<1x256xf32> to vector<4x256xf32>
    %76 = arith.mulf %73, %75 : vector<4x256xf32>
    %c0_45 = arith.constant 0 : index
    %c6_46 = arith.constant 6 : index
    %c0_47 = arith.constant 0 : index
    %c0_48 = arith.constant 0 : index
    %77 = vector.load %arg4[%c0_45, %c6_46, %c0_47, %c0_48] : memref<2x9x4x4xbf16, #tpu.memory_space<vmem>>, vector<1x1x4x4xbf16>
    %78 = vector.shape_cast %77 : vector<1x1x4x4xbf16> to vector<4x4xbf16>
    %79 = arith.truncf %76 : vector<4x256xf32> to vector<4x256xbf16>
    %cst_49 = arith.constant dense<0.000000e+00> : vector<4x256xf32>
    %80 = tpu.matmul %78, %79, %cst_49 {dimension_numbers = #tpu.dot_dimension_numbers<[1], [0], [0], [1], [0, 0, 1, 1], [], []>} : vector<4x4xbf16>, vector<4x256xbf16>, vector<4x256xf32> -> vector<4x256xf32>
    %81 = arith.addf %70, %80 : vector<4x256xf32>
    %82 = vector.extract_strided_slice %11 {offsets = [0, 16], sizes = [4, 240], strides = [1, 1]} : vector<4x256xf32> to vector<4x240xf32>
    %83 = vector.extract_strided_slice %11 {offsets = [0, 0], sizes = [4, 16], strides = [1, 1]} : vector<4x256xf32> to vector<4x16xf32>
    %84 = tpu.concatenate %82, %83 in 1 : vector<4x240xf32>, vector<4x16xf32> -> vector<4x256xf32>
    %c7 = arith.constant 7 : index
    %c0_50 = arith.constant 0 : index
    %85 = vector.load %arg8[%c7, %c0_50] : memref<9x256xf32, #tpu.memory_space<vmem>>, vector<1x256xf32>
    %86 = vector.broadcast %85 : vector<1x256xf32> to vector<4x256xf32>
    %87 = arith.mulf %84, %86 : vector<4x256xf32>
    %c0_51 = arith.constant 0 : index
    %c7_52 = arith.constant 7 : index
    %c0_53 = arith.constant 0 : index
    %c0_54 = arith.constant 0 : index
    %88 = vector.load %arg4[%c0_51, %c7_52, %c0_53, %c0_54] : memref<2x9x4x4xbf16, #tpu.memory_space<vmem>>, vector<1x1x4x4xbf16>
    %89 = vector.shape_cast %88 : vector<1x1x4x4xbf16> to vector<4x4xbf16>
    %90 = arith.truncf %87 : vector<4x256xf32> to vector<4x256xbf16>
    %cst_55 = arith.constant dense<0.000000e+00> : vector<4x256xf32>
    %91 = tpu.matmul %89, %90, %cst_55 {dimension_numbers = #tpu.dot_dimension_numbers<[1], [0], [0], [1], [0, 0, 1, 1], [], []>} : vector<4x4xbf16>, vector<4x256xbf16>, vector<4x256xf32> -> vector<4x256xf32>
    %92 = arith.addf %81, %91 : vector<4x256xf32>
    %93 = vector.extract_strided_slice %11 {offsets = [0, 17], sizes = [4, 239], strides = [1, 1]} : vector<4x256xf32> to vector<4x239xf32>
    %94 = vector.extract_strided_slice %11 {offsets = [0, 0], sizes = [4, 17], strides = [1, 1]} : vector<4x256xf32> to vector<4x17xf32>
    %95 = tpu.concatenate %93, %94 in 1 : vector<4x239xf32>, vector<4x17xf32> -> vector<4x256xf32>
    %c8 = arith.constant 8 : index
    %c0_56 = arith.constant 0 : index
    %96 = vector.load %arg8[%c8, %c0_56] : memref<9x256xf32, #tpu.memory_space<vmem>>, vector<1x256xf32>
    %97 = vector.broadcast %96 : vector<1x256xf32> to vector<4x256xf32>
    %98 = arith.mulf %95, %97 : vector<4x256xf32>
    %c0_57 = arith.constant 0 : index
    %c8_58 = arith.constant 8 : index
    %c0_59 = arith.constant 0 : index
    %c0_60 = arith.constant 0 : index
    %99 = vector.load %arg4[%c0_57, %c8_58, %c0_59, %c0_60] : memref<2x9x4x4xbf16, #tpu.memory_space<vmem>>, vector<1x1x4x4xbf16>
    %100 = vector.shape_cast %99 : vector<1x1x4x4xbf16> to vector<4x4xbf16>
    %101 = arith.truncf %98 : vector<4x256xf32> to vector<4x256xbf16>
    %cst_61 = arith.constant dense<0.000000e+00> : vector<4x256xf32>
    %102 = tpu.matmul %100, %101, %cst_61 {dimension_numbers = #tpu.dot_dimension_numbers<[1], [0], [0], [1], [0, 0, 1, 1], [], []>} : vector<4x4xbf16>, vector<4x256xbf16>, vector<4x256xf32> -> vector<4x256xf32>
    %103 = arith.addf %92, %102 : vector<4x256xf32>
    %c0_62 = arith.constant 0 : index
    %c0_63 = arith.constant 0 : index
    %c0_64 = arith.constant 0 : index
    %104 = vector.load %arg5[%c0_62, %c0_63, %c0_64] : memref<2x4x1xf32, #tpu.memory_space<vmem>>, vector<1x4x1xf32>
    %105 = vector.shape_cast %104 : vector<1x4x1xf32> to vector<4x1xf32>
    %106 = vector.broadcast %105 : vector<4x1xf32> to vector<4x256xf32>
    %107 = arith.addf %103, %106 : vector<4x256xf32>
    %cst_65 = arith.constant 0.000000e+00 : f32
    %108 = vector.broadcast %cst_65 : f32 to vector<4x256xf32>
    %109 = arith.maximumf %107, %108 : vector<4x256xf32>
    %c0_66 = arith.constant 0 : index
    %c0_67 = arith.constant 0 : index
    %c0_68 = arith.constant 0 : index
    %110 = vector.load %arg6[%c0_66, %c0_67, %c0_68] : memref<2x8x4xbf16, #tpu.memory_space<vmem>>, vector<1x8x4xbf16>
    %111 = vector.shape_cast %110 : vector<1x8x4xbf16> to vector<8x4xbf16>
    %112 = arith.truncf %109 : vector<4x256xf32> to vector<4x256xbf16>
    %cst_69 = arith.constant dense<0.000000e+00> : vector<8x256xf32>
    %113 = tpu.matmul %111, %112, %cst_69 {dimension_numbers = #tpu.dot_dimension_numbers<[1], [0], [0], [1], [0, 0, 1, 1], [], []>} : vector<8x4xbf16>, vector<4x256xbf16>, vector<8x256xf32> -> vector<8x256xf32>
    %c0_70 = arith.constant 0 : index
    %c0_71 = arith.constant 0 : index
    %c0_72 = arith.constant 0 : index
    %114 = vector.load %arg7[%c0_70, %c0_71, %c0_72] : memref<2x8x1xf32, #tpu.memory_space<vmem>>, vector<1x8x1xf32>
    %115 = vector.shape_cast %114 : vector<1x8x1xf32> to vector<8x1xf32>
    %116 = vector.broadcast %115 : vector<8x1xf32> to vector<8x256xf32>
    %117 = arith.addf %113, %116 : vector<8x256xf32>
    %118 = arith.addf %117, %1 : vector<8x256xf32>
    %c1_73 = arith.constant 1 : index
    %c0_74 = arith.constant 0 : index
    %c0_75 = arith.constant 0 : index
    %119 = vector.load %arg2[%c1_73, %c0_74, %c0_75] : memref<2x4x8xbf16, #tpu.memory_space<vmem>>, vector<1x4x8xbf16>
    %120 = vector.shape_cast %119 : vector<1x4x8xbf16> to vector<4x8xbf16>
    %121 = arith.truncf %118 : vector<8x256xf32> to vector<8x256xbf16>
    %cst_76 = arith.constant dense<0.000000e+00> : vector<4x256xf32>
    %122 = tpu.matmul %120, %121, %cst_76 {dimension_numbers = #tpu.dot_dimension_numbers<[1], [0], [0], [1], [0, 0, 1, 1], [], []>} : vector<4x8xbf16>, vector<8x256xbf16>, vector<4x256xf32> -> vector<4x256xf32>
    %c1_77 = arith.constant 1 : index
    %c0_78 = arith.constant 0 : index
    %c0_79 = arith.constant 0 : index
    %123 = vector.load %arg3[%c1_77, %c0_78, %c0_79] : memref<2x4x1xf32, #tpu.memory_space<vmem>>, vector<1x4x1xf32>
    %124 = vector.shape_cast %123 : vector<1x4x1xf32> to vector<4x1xf32>
    %125 = vector.broadcast %124 : vector<4x1xf32> to vector<4x256xf32>
    %126 = arith.addf %122, %125 : vector<4x256xf32>
    %cst_80 = arith.constant 0.000000e+00 : f32
    %127 = vector.broadcast %cst_80 : f32 to vector<4x256xf32>
    %128 = arith.maximumf %126, %127 : vector<4x256xf32>
    %129 = vector.extract_strided_slice %128 {offsets = [0, 239], sizes = [4, 17], strides = [1, 1]} : vector<4x256xf32> to vector<4x17xf32>
    %130 = vector.extract_strided_slice %128 {offsets = [0, 0], sizes = [4, 239], strides = [1, 1]} : vector<4x256xf32> to vector<4x239xf32>
    %131 = tpu.concatenate %129, %130 in 1 : vector<4x17xf32>, vector<4x239xf32> -> vector<4x256xf32>
    %c0_81 = arith.constant 0 : index
    %c0_82 = arith.constant 0 : index
    %132 = vector.load %arg8[%c0_81, %c0_82] : memref<9x256xf32, #tpu.memory_space<vmem>>, vector<1x256xf32>
    %133 = vector.broadcast %132 : vector<1x256xf32> to vector<4x256xf32>
    %134 = arith.mulf %131, %133 : vector<4x256xf32>
    %c1_83 = arith.constant 1 : index
    %c0_84 = arith.constant 0 : index
    %c0_85 = arith.constant 0 : index
    %c0_86 = arith.constant 0 : index
    %135 = vector.load %arg4[%c1_83, %c0_84, %c0_85, %c0_86] : memref<2x9x4x4xbf16, #tpu.memory_space<vmem>>, vector<1x1x4x4xbf16>
    %136 = vector.shape_cast %135 : vector<1x1x4x4xbf16> to vector<4x4xbf16>
    %137 = arith.truncf %134 : vector<4x256xf32> to vector<4x256xbf16>
    %cst_87 = arith.constant dense<0.000000e+00> : vector<4x256xf32>
    %138 = tpu.matmul %136, %137, %cst_87 {dimension_numbers = #tpu.dot_dimension_numbers<[1], [0], [0], [1], [0, 0, 1, 1], [], []>} : vector<4x4xbf16>, vector<4x256xbf16>, vector<4x256xf32> -> vector<4x256xf32>
    %139 = vector.extract_strided_slice %128 {offsets = [0, 240], sizes = [4, 16], strides = [1, 1]} : vector<4x256xf32> to vector<4x16xf32>
    %140 = vector.extract_strided_slice %128 {offsets = [0, 0], sizes = [4, 240], strides = [1, 1]} : vector<4x256xf32> to vector<4x240xf32>
    %141 = tpu.concatenate %139, %140 in 1 : vector<4x16xf32>, vector<4x240xf32> -> vector<4x256xf32>
    %c1_88 = arith.constant 1 : index
    %c0_89 = arith.constant 0 : index
    %142 = vector.load %arg8[%c1_88, %c0_89] : memref<9x256xf32, #tpu.memory_space<vmem>>, vector<1x256xf32>
    %143 = vector.broadcast %142 : vector<1x256xf32> to vector<4x256xf32>
    %144 = arith.mulf %141, %143 : vector<4x256xf32>
    %c1_90 = arith.constant 1 : index
    %c1_91 = arith.constant 1 : index
    %c0_92 = arith.constant 0 : index
    %c0_93 = arith.constant 0 : index
    %145 = vector.load %arg4[%c1_90, %c1_91, %c0_92, %c0_93] : memref<2x9x4x4xbf16, #tpu.memory_space<vmem>>, vector<1x1x4x4xbf16>
    %146 = vector.shape_cast %145 : vector<1x1x4x4xbf16> to vector<4x4xbf16>
    %147 = arith.truncf %144 : vector<4x256xf32> to vector<4x256xbf16>
    %cst_94 = arith.constant dense<0.000000e+00> : vector<4x256xf32>
    %148 = tpu.matmul %146, %147, %cst_94 {dimension_numbers = #tpu.dot_dimension_numbers<[1], [0], [0], [1], [0, 0, 1, 1], [], []>} : vector<4x4xbf16>, vector<4x256xbf16>, vector<4x256xf32> -> vector<4x256xf32>
    %149 = arith.addf %138, %148 : vector<4x256xf32>
    %150 = vector.extract_strided_slice %128 {offsets = [0, 241], sizes = [4, 15], strides = [1, 1]} : vector<4x256xf32> to vector<4x15xf32>
    %151 = vector.extract_strided_slice %128 {offsets = [0, 0], sizes = [4, 241], strides = [1, 1]} : vector<4x256xf32> to vector<4x241xf32>
    %152 = tpu.concatenate %150, %151 in 1 : vector<4x15xf32>, vector<4x241xf32> -> vector<4x256xf32>
    %c2_95 = arith.constant 2 : index
    %c0_96 = arith.constant 0 : index
    %153 = vector.load %arg8[%c2_95, %c0_96] : memref<9x256xf32, #tpu.memory_space<vmem>>, vector<1x256xf32>
    %154 = vector.broadcast %153 : vector<1x256xf32> to vector<4x256xf32>
    %155 = arith.mulf %152, %154 : vector<4x256xf32>
    %c1_97 = arith.constant 1 : index
    %c2_98 = arith.constant 2 : index
    %c0_99 = arith.constant 0 : index
    %c0_100 = arith.constant 0 : index
    %156 = vector.load %arg4[%c1_97, %c2_98, %c0_99, %c0_100] : memref<2x9x4x4xbf16, #tpu.memory_space<vmem>>, vector<1x1x4x4xbf16>
    %157 = vector.shape_cast %156 : vector<1x1x4x4xbf16> to vector<4x4xbf16>
    %158 = arith.truncf %155 : vector<4x256xf32> to vector<4x256xbf16>
    %cst_101 = arith.constant dense<0.000000e+00> : vector<4x256xf32>
    %159 = tpu.matmul %157, %158, %cst_101 {dimension_numbers = #tpu.dot_dimension_numbers<[1], [0], [0], [1], [0, 0, 1, 1], [], []>} : vector<4x4xbf16>, vector<4x256xbf16>, vector<4x256xf32> -> vector<4x256xf32>
    %160 = arith.addf %149, %159 : vector<4x256xf32>
    %161 = vector.extract_strided_slice %128 {offsets = [0, 255], sizes = [4, 1], strides = [1, 1]} : vector<4x256xf32> to vector<4x1xf32>
    %162 = vector.extract_strided_slice %128 {offsets = [0, 0], sizes = [4, 255], strides = [1, 1]} : vector<4x256xf32> to vector<4x255xf32>
    %163 = tpu.concatenate %161, %162 in 1 : vector<4x1xf32>, vector<4x255xf32> -> vector<4x256xf32>
    %c3_102 = arith.constant 3 : index
    %c0_103 = arith.constant 0 : index
    %164 = vector.load %arg8[%c3_102, %c0_103] : memref<9x256xf32, #tpu.memory_space<vmem>>, vector<1x256xf32>
    %165 = vector.broadcast %164 : vector<1x256xf32> to vector<4x256xf32>
    %166 = arith.mulf %163, %165 : vector<4x256xf32>
    %c1_104 = arith.constant 1 : index
    %c3_105 = arith.constant 3 : index
    %c0_106 = arith.constant 0 : index
    %c0_107 = arith.constant 0 : index
    %167 = vector.load %arg4[%c1_104, %c3_105, %c0_106, %c0_107] : memref<2x9x4x4xbf16, #tpu.memory_space<vmem>>, vector<1x1x4x4xbf16>
    %168 = vector.shape_cast %167 : vector<1x1x4x4xbf16> to vector<4x4xbf16>
    %169 = arith.truncf %166 : vector<4x256xf32> to vector<4x256xbf16>
    %cst_108 = arith.constant dense<0.000000e+00> : vector<4x256xf32>
    %170 = tpu.matmul %168, %169, %cst_108 {dimension_numbers = #tpu.dot_dimension_numbers<[1], [0], [0], [1], [0, 0, 1, 1], [], []>} : vector<4x4xbf16>, vector<4x256xbf16>, vector<4x256xf32> -> vector<4x256xf32>
    %171 = arith.addf %160, %170 : vector<4x256xf32>
    %c1_109 = arith.constant 1 : index
    %c4_110 = arith.constant 4 : index
    %c0_111 = arith.constant 0 : index
    %c0_112 = arith.constant 0 : index
    %172 = vector.load %arg4[%c1_109, %c4_110, %c0_111, %c0_112] : memref<2x9x4x4xbf16, #tpu.memory_space<vmem>>, vector<1x1x4x4xbf16>
    %173 = vector.shape_cast %172 : vector<1x1x4x4xbf16> to vector<4x4xbf16>
    %174 = arith.truncf %128 : vector<4x256xf32> to vector<4x256xbf16>
    %cst_113 = arith.constant dense<0.000000e+00> : vector<4x256xf32>
    %175 = tpu.matmul %173, %174, %cst_113 {dimension_numbers = #tpu.dot_dimension_numbers<[1], [0], [0], [1], [0, 0, 1, 1], [], []>} : vector<4x4xbf16>, vector<4x256xbf16>, vector<4x256xf32> -> vector<4x256xf32>
    %176 = arith.addf %171, %175 : vector<4x256xf32>
    %177 = vector.extract_strided_slice %128 {offsets = [0, 1], sizes = [4, 255], strides = [1, 1]} : vector<4x256xf32> to vector<4x255xf32>
    %178 = vector.extract_strided_slice %128 {offsets = [0, 0], sizes = [4, 1], strides = [1, 1]} : vector<4x256xf32> to vector<4x1xf32>
    %179 = tpu.concatenate %177, %178 in 1 : vector<4x255xf32>, vector<4x1xf32> -> vector<4x256xf32>
    %c5_114 = arith.constant 5 : index
    %c0_115 = arith.constant 0 : index
    %180 = vector.load %arg8[%c5_114, %c0_115] : memref<9x256xf32, #tpu.memory_space<vmem>>, vector<1x256xf32>
    %181 = vector.broadcast %180 : vector<1x256xf32> to vector<4x256xf32>
    %182 = arith.mulf %179, %181 : vector<4x256xf32>
    %c1_116 = arith.constant 1 : index
    %c5_117 = arith.constant 5 : index
    %c0_118 = arith.constant 0 : index
    %c0_119 = arith.constant 0 : index
    %183 = vector.load %arg4[%c1_116, %c5_117, %c0_118, %c0_119] : memref<2x9x4x4xbf16, #tpu.memory_space<vmem>>, vector<1x1x4x4xbf16>
    %184 = vector.shape_cast %183 : vector<1x1x4x4xbf16> to vector<4x4xbf16>
    %185 = arith.truncf %182 : vector<4x256xf32> to vector<4x256xbf16>
    %cst_120 = arith.constant dense<0.000000e+00> : vector<4x256xf32>
    %186 = tpu.matmul %184, %185, %cst_120 {dimension_numbers = #tpu.dot_dimension_numbers<[1], [0], [0], [1], [0, 0, 1, 1], [], []>} : vector<4x4xbf16>, vector<4x256xbf16>, vector<4x256xf32> -> vector<4x256xf32>
    %187 = arith.addf %176, %186 : vector<4x256xf32>
    %188 = vector.extract_strided_slice %128 {offsets = [0, 15], sizes = [4, 241], strides = [1, 1]} : vector<4x256xf32> to vector<4x241xf32>
    %189 = vector.extract_strided_slice %128 {offsets = [0, 0], sizes = [4, 15], strides = [1, 1]} : vector<4x256xf32> to vector<4x15xf32>
    %190 = tpu.concatenate %188, %189 in 1 : vector<4x241xf32>, vector<4x15xf32> -> vector<4x256xf32>
    %c6_121 = arith.constant 6 : index
    %c0_122 = arith.constant 0 : index
    %191 = vector.load %arg8[%c6_121, %c0_122] : memref<9x256xf32, #tpu.memory_space<vmem>>, vector<1x256xf32>
    %192 = vector.broadcast %191 : vector<1x256xf32> to vector<4x256xf32>
    %193 = arith.mulf %190, %192 : vector<4x256xf32>
    %c1_123 = arith.constant 1 : index
    %c6_124 = arith.constant 6 : index
    %c0_125 = arith.constant 0 : index
    %c0_126 = arith.constant 0 : index
    %194 = vector.load %arg4[%c1_123, %c6_124, %c0_125, %c0_126] : memref<2x9x4x4xbf16, #tpu.memory_space<vmem>>, vector<1x1x4x4xbf16>
    %195 = vector.shape_cast %194 : vector<1x1x4x4xbf16> to vector<4x4xbf16>
    %196 = arith.truncf %193 : vector<4x256xf32> to vector<4x256xbf16>
    %cst_127 = arith.constant dense<0.000000e+00> : vector<4x256xf32>
    %197 = tpu.matmul %195, %196, %cst_127 {dimension_numbers = #tpu.dot_dimension_numbers<[1], [0], [0], [1], [0, 0, 1, 1], [], []>} : vector<4x4xbf16>, vector<4x256xbf16>, vector<4x256xf32> -> vector<4x256xf32>
    %198 = arith.addf %187, %197 : vector<4x256xf32>
    %199 = vector.extract_strided_slice %128 {offsets = [0, 16], sizes = [4, 240], strides = [1, 1]} : vector<4x256xf32> to vector<4x240xf32>
    %200 = vector.extract_strided_slice %128 {offsets = [0, 0], sizes = [4, 16], strides = [1, 1]} : vector<4x256xf32> to vector<4x16xf32>
    %201 = tpu.concatenate %199, %200 in 1 : vector<4x240xf32>, vector<4x16xf32> -> vector<4x256xf32>
    %c7_128 = arith.constant 7 : index
    %c0_129 = arith.constant 0 : index
    %202 = vector.load %arg8[%c7_128, %c0_129] : memref<9x256xf32, #tpu.memory_space<vmem>>, vector<1x256xf32>
    %203 = vector.broadcast %202 : vector<1x256xf32> to vector<4x256xf32>
    %204 = arith.mulf %201, %203 : vector<4x256xf32>
    %c1_130 = arith.constant 1 : index
    %c7_131 = arith.constant 7 : index
    %c0_132 = arith.constant 0 : index
    %c0_133 = arith.constant 0 : index
    %205 = vector.load %arg4[%c1_130, %c7_131, %c0_132, %c0_133] : memref<2x9x4x4xbf16, #tpu.memory_space<vmem>>, vector<1x1x4x4xbf16>
    %206 = vector.shape_cast %205 : vector<1x1x4x4xbf16> to vector<4x4xbf16>
    %207 = arith.truncf %204 : vector<4x256xf32> to vector<4x256xbf16>
    %cst_134 = arith.constant dense<0.000000e+00> : vector<4x256xf32>
    %208 = tpu.matmul %206, %207, %cst_134 {dimension_numbers = #tpu.dot_dimension_numbers<[1], [0], [0], [1], [0, 0, 1, 1], [], []>} : vector<4x4xbf16>, vector<4x256xbf16>, vector<4x256xf32> -> vector<4x256xf32>
    %209 = arith.addf %198, %208 : vector<4x256xf32>
    %210 = vector.extract_strided_slice %128 {offsets = [0, 17], sizes = [4, 239], strides = [1, 1]} : vector<4x256xf32> to vector<4x239xf32>
    %211 = vector.extract_strided_slice %128 {offsets = [0, 0], sizes = [4, 17], strides = [1, 1]} : vector<4x256xf32> to vector<4x17xf32>
    %212 = tpu.concatenate %210, %211 in 1 : vector<4x239xf32>, vector<4x17xf32> -> vector<4x256xf32>
    %c8_135 = arith.constant 8 : index
    %c0_136 = arith.constant 0 : index
    %213 = vector.load %arg8[%c8_135, %c0_136] : memref<9x256xf32, #tpu.memory_space<vmem>>, vector<1x256xf32>
    %214 = vector.broadcast %213 : vector<1x256xf32> to vector<4x256xf32>
    %215 = arith.mulf %212, %214 : vector<4x256xf32>
    %c1_137 = arith.constant 1 : index
    %c8_138 = arith.constant 8 : index
    %c0_139 = arith.constant 0 : index
    %c0_140 = arith.constant 0 : index
    %216 = vector.load %arg4[%c1_137, %c8_138, %c0_139, %c0_140] : memref<2x9x4x4xbf16, #tpu.memory_space<vmem>>, vector<1x1x4x4xbf16>
    %217 = vector.shape_cast %216 : vector<1x1x4x4xbf16> to vector<4x4xbf16>
    %218 = arith.truncf %215 : vector<4x256xf32> to vector<4x256xbf16>
    %cst_141 = arith.constant dense<0.000000e+00> : vector<4x256xf32>
    %219 = tpu.matmul %217, %218, %cst_141 {dimension_numbers = #tpu.dot_dimension_numbers<[1], [0], [0], [1], [0, 0, 1, 1], [], []>} : vector<4x4xbf16>, vector<4x256xbf16>, vector<4x256xf32> -> vector<4x256xf32>
    %220 = arith.addf %209, %219 : vector<4x256xf32>
    %c1_142 = arith.constant 1 : index
    %c0_143 = arith.constant 0 : index
    %c0_144 = arith.constant 0 : index
    %221 = vector.load %arg5[%c1_142, %c0_143, %c0_144] : memref<2x4x1xf32, #tpu.memory_space<vmem>>, vector<1x4x1xf32>
    %222 = vector.shape_cast %221 : vector<1x4x1xf32> to vector<4x1xf32>
    %223 = vector.broadcast %222 : vector<4x1xf32> to vector<4x256xf32>
    %224 = arith.addf %220, %223 : vector<4x256xf32>
    %cst_145 = arith.constant 0.000000e+00 : f32
    %225 = vector.broadcast %cst_145 : f32 to vector<4x256xf32>
    %226 = arith.maximumf %224, %225 : vector<4x256xf32>
    %c1_146 = arith.constant 1 : index
    %c0_147 = arith.constant 0 : index
    %c0_148 = arith.constant 0 : index
    %227 = vector.load %arg6[%c1_146, %c0_147, %c0_148] : memref<2x8x4xbf16, #tpu.memory_space<vmem>>, vector<1x8x4xbf16>
    %228 = vector.shape_cast %227 : vector<1x8x4xbf16> to vector<8x4xbf16>
    %229 = arith.truncf %226 : vector<4x256xf32> to vector<4x256xbf16>
    %cst_149 = arith.constant dense<0.000000e+00> : vector<8x256xf32>
    %230 = tpu.matmul %228, %229, %cst_149 {dimension_numbers = #tpu.dot_dimension_numbers<[1], [0], [0], [1], [0, 0, 1, 1], [], []>} : vector<8x4xbf16>, vector<4x256xbf16>, vector<8x256xf32> -> vector<8x256xf32>
    %c1_150 = arith.constant 1 : index
    %c0_151 = arith.constant 0 : index
    %c0_152 = arith.constant 0 : index
    %231 = vector.load %arg7[%c1_150, %c0_151, %c0_152] : memref<2x8x1xf32, #tpu.memory_space<vmem>>, vector<1x8x1xf32>
    %232 = vector.shape_cast %231 : vector<1x8x1xf32> to vector<8x1xf32>
    %233 = vector.broadcast %232 : vector<8x1xf32> to vector<8x256xf32>
    %234 = arith.addf %230, %233 : vector<8x256xf32>
    %235 = arith.addf %234, %118 : vector<8x256xf32>
    %c0_153 = arith.constant 0 : index
    %c0_154 = arith.constant 0 : index
    %c0_155 = arith.constant 0 : index
    %236 = vector.load %arg9[%c0_153, %c0_154, %c0_155] : memref<1x8x256xf32, #tpu.memory_space<vmem>>, vector<1x8x256xf32>
    %237 = vector.shape_cast %236 : vector<1x8x256xf32> to vector<8x256xf32>
    %238 = vector.shape_cast %235 : vector<8x256xf32> to vector<1x8x256xf32>
    tpu.vector_store %arg9[%c0_153, %c0_154, %c0_155], %238 {strides = array<i32>} : memref<1x8x256xf32, #tpu.memory_space<vmem>>, vector<1x8x256xf32>,
    return
  }
  func.func @transform_0(%arg0: i32) -> (i32, i32, i32) {
    %c0_i32 = arith.constant 0 : i32
    %c0_i32_0 = arith.constant 0 : i32
    %c0_i32_1 = arith.constant 0 : i32
    return %arg0, %c0_i32, %c0_i32_0 : i32, i32, i32
  }
  func.func @transform_1(%arg0: i32) -> (i32, i32, i32) {
    %c0_i32 = arith.constant 0 : i32
    %c0_i32_0 = arith.constant 0 : i32
    %c0_i32_1 = arith.constant 0 : i32
    %c0_i32_2 = arith.constant 0 : i32
    return %c0_i32, %c0_i32_0, %c0_i32_1 : i32, i32, i32
  }
  func.func @transform_2(%arg0: i32) -> (i32, i32, i32) {
    %c0_i32 = arith.constant 0 : i32
    %c0_i32_0 = arith.constant 0 : i32
    %c0_i32_1 = arith.constant 0 : i32
    %c0_i32_2 = arith.constant 0 : i32
    return %c0_i32, %c0_i32_0, %c0_i32_1 : i32, i32, i32
  }
  func.func @transform_3(%arg0: i32) -> (i32, i32, i32, i32) {
    %c0_i32 = arith.constant 0 : i32
    %c0_i32_0 = arith.constant 0 : i32
    %c0_i32_1 = arith.constant 0 : i32
    %c0_i32_2 = arith.constant 0 : i32
    %c0_i32_3 = arith.constant 0 : i32
    return %c0_i32, %c0_i32_0, %c0_i32_1, %c0_i32_2 : i32, i32, i32, i32
  }
  func.func @transform_4(%arg0: i32) -> (i32, i32, i32) {
    %c0_i32 = arith.constant 0 : i32
    %c0_i32_0 = arith.constant 0 : i32
    %c0_i32_1 = arith.constant 0 : i32
    %c0_i32_2 = arith.constant 0 : i32
    return %c0_i32, %c0_i32_0, %c0_i32_1 : i32, i32, i32
  }
  func.func @transform_5(%arg0: i32) -> (i32, i32, i32) {
    %c0_i32 = arith.constant 0 : i32
    %c0_i32_0 = arith.constant 0 : i32
    %c0_i32_1 = arith.constant 0 : i32
    %c0_i32_2 = arith.constant 0 : i32
    return %c0_i32, %c0_i32_0, %c0_i32_1 : i32, i32, i32
  }
  func.func @transform_6(%arg0: i32) -> (i32, i32, i32) {
    %c0_i32 = arith.constant 0 : i32
    %c0_i32_0 = arith.constant 0 : i32
    %c0_i32_1 = arith.constant 0 : i32
    %c0_i32_2 = arith.constant 0 : i32
    return %c0_i32, %c0_i32_0, %c0_i32_1 : i32, i32, i32
  }
  func.func @transform_7(%arg0: i32) -> (i32, i32) {
    %c0_i32 = arith.constant 0 : i32
    %c0_i32_0 = arith.constant 0 : i32
    %c0_i32_1 = arith.constant 0 : i32
    return %c0_i32, %c0_i32_0 : i32, i32
  }
  func.func @transform_8(%arg0: i32) -> (i32, i32, i32) {
    %c0_i32 = arith.constant 0 : i32
    %c0_i32_0 = arith.constant 0 : i32
    %c0_i32_1 = arith.constant 0 : i32
    return %arg0, %c0_i32, %c0_i32_0 : i32, i32, i32
  }
}

</mosaic_0001>

<llo_original>
// kernel: stacked_residual_forward.1
$region0: #{stacked_residual_forward.1}
  #allocation0 [shape = 'u32[]', space=smem, size = 0x4, offset = 0x4, fixed_abs, tag = 'smem constant byte address 0x4 - core index']
  #allocation1 [shape = 'u32[144,128]{1,0:T(1,128)}', space=vmem, size = 0x12000, scoped, tag = 'internal scratch']
  %s0 = inlined_call_operand.vmem [shape: f32[2,8,256], index: 0, kind: input, shape index: {}]
  %s1 = inlined_call_operand.vmem [shape: bf16[2,4,8], index: 1, kind: input, shape index: {}]
  %s2 = inlined_call_operand.vmem [shape: f32[2,4,1], index: 2, kind: input, shape index: {}]
  %s3 = inlined_call_operand.vmem [shape: bf16[2,9,4,4], index: 3, kind: input, shape index: {}]
  %s4 = inlined_call_operand.vmem [shape: f32[2,4,1], index: 4, kind: input, shape index: {}]
  %s5 = inlined_call_operand.vmem [shape: bf16[2,8,4], index: 5, kind: input, shape index: {}]
  %s6 = inlined_call_operand.vmem [shape: f32[2,8,1], index: 6, kind: input, shape index: {}]
  %s7 = inlined_call_operand.vmem [shape: f32[9,256], index: 7, kind: input, shape index: {}]
  %s8 = inlined_call_operand.vmem [shape: f32[2,8,256], index: 8, kind: output, shape index: {}]
  %s9 = sld [smem:[#allocation0]]
  $region65: #{stacked_residual_forward.1} parent=0
    _
  %s11 = ssub.s32 1, %s9
  %s12 = scalar_select 0, %s11, %s9
  loop: start=0, step=1, limit=4
  $region2: #{stacked_residual_forward.1} parent=0 // loop_pre_header
    _
  $region3: #{stacked_residual_forward.1} parent=0 // loop_header
    %s14 = sphi 0, %s18
    %p15 = scmp.ge.s32.totalorder %s14, 4
    %s24 = sphi 0, %s26
    %s27 = sphi 0, %s24
    %s28 = sphi 0, %s27
    %s44 = sphi 0, %s28
    %s48 = sphi 0, %s48
    %s50 = sphi 0, %s48
    %s51 = sphi 0, %s50
    %s65 = sphi 0, %s51
    %s69 = sphi 0, %s69
    %s71 = sphi 0, %s69
    %s72 = sphi 0, %s71
    %s86 = sphi 0, %s72
    %s90 = sphi 0, %s90
    %s92 = sphi 0, %s90
    %s93 = sphi 0, %s92
    %s107 = sphi 0, %s93
    %s111 = sphi 0, %s111
    %s113 = sphi 0, %s111
    %s114 = sphi 0, %s113
    %s128 = sphi 0, %s114
    %s132 = sphi 0, %s132
    %s134 = sphi 0, %s132
    %s135 = sphi 0, %s134
    %s149 = sphi 0, %s135
    %s153 = sphi 0, %s153
    %s155 = sphi 0, %s153
    %s156 = sphi 0, %s155
    %s170 = sphi 0, %s156
    %s174 = sphi 0, %s174
    %s176 = sphi 0, %s174
    %s177 = sphi 0, %s176
    %s191 = sphi 0, %s177
    %s197 = sphi 0, %s199
    %s200 = sphi 0, %s197
    %s201 = sphi 0, %s200
    %s217 = sphi 0, %s201
  $region4: #{stacked_residual_forward.1} parent=0 // loop_header_branch
    %17 = sbr.rel (%p15) target = $region8
  $region5: #{stacked_residual_forward.1} parent=0 // loop_body
    %s19 = ssub.s32 %s14, 1
    %s20 = ssub.s32 %s14, 2
    %s21 = sadd.s32 %s14, 1
    %s22 = ssub.s32 %s14, %s21
    %p23 = scmp.eq.s32.totalorder %s22, 0
    %s25 = sadd.s32 %s24, 1
    %s26 = scalar_select %p23, %s24, %s25
    %p29 = pneg %p23
    %p30 = scmp.eq.s32.totalorder %s14, 1
    %p31 = por %p29, %p30
    %p32 = scmp.ne.s32.totalorder %s24, %s27
    %p33 = scmp.eq.s32.totalorder %s14, 0
    %p34 = por %p32, %p33
    %p35 = scmp.ne.s32.totalorder %s24, %s27
    %p36 = scmp.eq.s32.totalorder %s19, 1
    %p37 = por %p35, %p36
    %p38 = scmp.ne.s32.totalorder %s27, %s28
    %p39 = scmp.eq.s32.totalorder %s19, 0
    %p40 = por %p38, %p39
    %p41 = scmp.ne.s32.totalorder %s27, %s28
    %p42 = scmp.eq.s32.totalorder %s20, 1
    %p43 = por %p41, %p42
    %p45 = scmp.ne.s32.totalorder %s28, %s44
    %p46 = scmp.eq.s32.totalorder %s20, 0
    %p47 = por %p45, %p46
    %s49 = sadd.s32 %s48, 1
    %p52 = scmp.eq.s32.totalorder %s14, 1
    %p53 = scmp.ne.s32.totalorder %s48, %s50
    %p54 = scmp.eq.s32.totalorder %s14, 0
    %p55 = por %p53, %p54
    %p56 = scmp.ne.s32.totalorder %s48, %s50
    %p57 = scmp.eq.s32.totalorder %s19, 1
    %p58 = por %p56, %p57
    %p59 = scmp.ne.s32.totalorder %s50, %s51
    %p60 = scmp.eq.s32.totalorder %s19, 0
    %p61 = por %p59, %p60
    %p62 = scmp.ne.s32.totalorder %s50, %s51
    %p63 = scmp.eq.s32.totalorder %s20, 1
    %p64 = por %p62, %p63
    %p66 = scmp.ne.s32.totalorder %s51, %s65
    %p67 = scmp.eq.s32.totalorder %s20, 0
    %p68 = por %p66, %p67
    %s70 = sadd.s32 %s69, 1
    %p73 = scmp.eq.s32.totalorder %s14, 1
    %p74 = scmp.ne.s32.totalorder %s69, %s71
    %p75 = scmp.eq.s32.totalorder %s14, 0
    %p76 = por %p74, %p75
    %p77 = scmp.ne.s32.totalorder %s69, %s71
    %p78 = scmp.eq.s32.totalorder %s19, 1
    %p79 = por %p77, %p78
    %p80 = scmp.ne.s32.totalorder %s71, %s72
    %p81 = scmp.eq.s32.totalorder %s19, 0
    %p82 = por %p80, %p81
    %p83 = scmp.ne.s32.totalorder %s71, %s72
    %p84 = scmp.eq.s32.totalorder %s20, 1
    %p85 = por %p83, %p84
    %p87 = scmp.ne.s32.totalorder %s72, %s86
    %p88 = scmp.eq.s32.totalorder %s20, 0
    %p89 = por %p87, %p88
    %s91 = sadd.s32 %s90, 1
    %p94 = scmp.eq.s32.totalorder %s14, 1
    %p95 = scmp.ne.s32.totalorder %s90, %s92
    %p96 = scmp.eq.s32.totalorder %s14, 0
    %p97 = por %p95, %p96
    %p98 = scmp.ne.s32.totalorder %s90, %s92
    %p99 = scmp.eq.s32.totalorder %s19, 1
    %p100 = por %p98, %p99
    %p101 = scmp.ne.s32.totalorder %s92, %s93
    %p102 = scmp.eq.s32.totalorder %s19, 0
    %p103 = por %p101, %p102
    %p104 = scmp.ne.s32.totalorder %s92, %s93
    %p105 = scmp.eq.s32.totalorder %s20, 1
    %p106 = por %p104, %p105
    %p108 = scmp.ne.s32.totalorder %s93, %s107
    %p109 = scmp.eq.s32.totalorder %s20, 0
    %p110 = por %p108, %p109
    %s112 = sadd.s32 %s111, 1
    %p115 = scmp.eq.s32.totalorder %s14, 1
    %p116 = scmp.ne.s32.totalorder %s111, %s113
    %p117 = scmp.eq.s32.totalorder %s14, 0
    %p118 = por %p116, %p117
    %p119 = scmp.ne.s32.totalorder %s111, %s113
    %p120 = scmp.eq.s32.totalorder %s19, 1
    %p121 = por %p119, %p120
    %p122 = scmp.ne.s32.totalorder %s113, %s114
    %p123 = scmp.eq.s32.totalorder %s19, 0
    %p124 = por %p122, %p123
    %p125 = scmp.ne.s32.totalorder %s113, %s114
    %p126 = scmp.eq.s32.totalorder %s20, 1
    %p127 = por %p125, %p126
    %p129 = scmp.ne.s32.totalorder %s114, %s128
    %p130 = scmp.eq.s32.totalorder %s20, 0
    %p131 = por %p129, %p130
    %s133 = sadd.s32 %s132, 1
    %p136 = scmp.eq.s32.totalorder %s14, 1
    %p137 = scmp.ne.s32.totalorder %s132, %s134
    %p138 = scmp.eq.s32.totalorder %s14, 0
    %p139 = por %p137, %p138
    %p140 = scmp.ne.s32.totalorder %s132, %s134
    %p141 = scmp.eq.s32.totalorder %s19, 1
    %p142 = por %p140, %p141
    %p143 = scmp.ne.s32.totalorder %s134, %s135
    %p144 = scmp.eq.s32.totalorder %s19, 0
    %p145 = por %p143, %p144
    %p146 = scmp.ne.s32.totalorder %s134, %s135
    %p147 = scmp.eq.s32.totalorder %s20, 1
    %p148 = por %p146, %p147
    %p150 = scmp.ne.s32.totalorder %s135, %s149
    %p151 = scmp.eq.s32.totalorder %s20, 0
    %p152 = por %p150, %p151
    %s154 = sadd.s32 %s153, 1
    %p157 = scmp.eq.s32.totalorder %s14, 1
    %p158 = scmp.ne.s32.totalorder %s153, %s155
    %p159 = scmp.eq.s32.totalorder %s14, 0
    %p160 = por %p158, %p159
    %p161 = scmp.ne.s32.totalorder %s153, %s155
    %p162 = scmp.eq.s32.totalorder %s19, 1
    %p163 = por %p161, %p162
    %p164 = scmp.ne.s32.totalorder %s155, %s156
    %p165 = scmp.eq.s32.totalorder %s19, 0
    %p166 = por %p164, %p165
    %p167 = scmp.ne.s32.totalorder %s155, %s156
    %p168 = scmp.eq.s32.totalorder %s20, 1
    %p169 = por %p167, %p168
    %p171 = scmp.ne.s32.totalorder %s156, %s170
    %p172 = scmp.eq.s32.totalorder %s20, 0
    %p173 = por %p171, %p172
    %s175 = sadd.s32 %s174, 1
    %p178 = scmp.eq.s32.totalorder %s14, 1
    %p179 = scmp.ne.s32.totalorder %s174, %s176
    %p180 = scmp.eq.s32.totalorder %s14, 0
    %p181 = por %p179, %p180
    %p182 = scmp.ne.s32.totalorder %s174, %s176
    %p183 = scmp.eq.s32.totalorder %s19, 1
    %p184 = por %p182, %p183
    %p185 = scmp.ne.s32.totalorder %s176, %s177
    %p186 = scmp.eq.s32.totalorder %s19, 0
    %p187 = por %p185, %p186
    %p188 = scmp.ne.s32.totalorder %s176, %s177
    %p189 = scmp.eq.s32.totalorder %s20, 1
    %p190 = por %p188, %p189
    %p192 = scmp.ne.s32.totalorder %s177, %s191
    %p193 = scmp.eq.s32.totalorder %s20, 0
    %p194 = por %p192, %p193
    %s195 = ssub.s32 %s14, %s21
    %p196 = scmp.eq.s32.totalorder %s195, 0
    %s198 = sadd.s32 %s197, 1
    %s199 = scalar_select %p196, %s197, %s198
    %p202 = pneg %p196
    %p203 = scmp.eq.s32.totalorder %s14, 1
    %p204 = por %p202, %p203
    %p205 = scmp.ne.s32.totalorder %s197, %s200
    %p206 = scmp.eq.s32.totalorder %s14, 0
    %p207 = por %p205, %p206
    %p208 = scmp.ne.s32.totalorder %s197, %s200
    %p209 = scmp.eq.s32.totalorder %s19, 1
    %p210 = por %p208, %p209
    %p211 = scmp.ne.s32.totalorder %s200, %s201
    %p212 = scmp.eq.s32.totalorder %s19, 0
    %p213 = por %p211, %p212
    %p214 = scmp.ne.s32.totalorder %s200, %s201
    %p215 = scmp.eq.s32.totalorder %s20, 1
    %p216 = por %p214, %p215
    %p218 = scmp.ne.s32.totalorder %s201, %s217
    %p219 = scmp.eq.s32.totalorder %s20, 0
    %p220 = por %p218, %p219
    %p221 = scmp.le.s32.totalorder 1, %s14
    %p222 = scmp.lt.s32.totalorder %s14, 3
    %p223 = pnand %p221, %p222
    %p224 = pneg %p223
    // Predicated region
    $region9: #{stacked_residual_forward.1} parent=5 // pred_check
      _
    $region10: #{stacked_residual_forward.1} parent=5 // pred_check_branch
      %226 = sbr.rel (%p223) target = $region12
    $region11: #{stacked_residual_forward.1} parent=5 // pred_region
      %s227 = ssub.s32 %s14, 1
      // Predicated region
      $region13: #{stacked_residual_forward.1} parent=11 // pred_check
        %p228 = pneg %p61
      $region14: #{stacked_residual_forward.1} parent=11 // pred_check_branch
        %230 = sbr.rel (%p228) target = $region16
      $region15: #{stacked_residual_forward.1} parent=11 // pred_region
        _
      $region16: #{stacked_residual_forward.1} parent=11 // pred_fallthru
        _
      // Predicated region
      $region17: #{stacked_residual_forward.1} parent=11 // pred_check
        %p231 = pneg %p82
      $region18: #{stacked_residual_forward.1} parent=11 // pred_check_branch
        %233 = sbr.rel (%p231) target = $region20
      $region19: #{stacked_residual_forward.1} parent=11 // pred_region
        _
      $region20: #{stacked_residual_forward.1} parent=11 // pred_fallthru
        _
      // Predicated region
      $region21: #{stacked_residual_forward.1} parent=11 // pred_check
        %p234 = pneg %p103
      $region22: #{stacked_residual_forward.1} parent=11 // pred_check_branch
        %236 = sbr.rel (%p234) target = $region24
      $region23: #{stacked_residual_forward.1} parent=11 // pred_region
        _
      $region24: #{stacked_residual_forward.1} parent=11 // pred_fallthru
        _
      // Predicated region
      $region25: #{stacked_residual_forward.1} parent=11 // pred_check
        %p237 = pneg %p124
      $region26: #{stacked_residual_forward.1} parent=11 // pred_check_branch
        %239 = sbr.rel (%p237) target = $region28
      $region27: #{stacked_residual_forward.1} parent=11 // pred_region
        _
      $region28: #{stacked_residual_forward.1} parent=11 // pred_fallthru
        _
      // Predicated region
      $region29: #{stacked_residual_forward.1} parent=11 // pred_check
        %p240 = pneg %p145
      $region30: #{stacked_residual_forward.1} parent=11 // pred_check_branch
        %242 = sbr.rel (%p240) target = $region32
      $region31: #{stacked_residual_forward.1} parent=11 // pred_region
        _
      $region32: #{stacked_residual_forward.1} parent=11 // pred_fallthru
        _
      // Predicated region
      $region33: #{stacked_residual_forward.1} parent=11 // pred_check
        %p243 = pneg %p166
      $region34: #{stacked_residual_forward.1} parent=11 // pred_check_branch
        %245 = sbr.rel (%p243) target = $region36
      $region35: #{stacked_residual_forward.1} parent=11 // pred_region
        _
      $region36: #{stacked_residual_forward.1} parent=11 // pred_fallthru
        _
      // Predicated region
      $region37: #{stacked_residual_forward.1} parent=11 // pred_check
        %p246 = pneg %p187
      $region38: #{stacked_residual_forward.1} parent=11 // pred_check_branch
        %248 = sbr.rel (%p246) target = $region40
      $region39: #{stacked_residual_forward.1} parent=11 // pred_region
        _
      $region40: #{stacked_residual_forward.1} parent=11 // pred_fallthru
        _
    $region12: #{stacked_residual_forward.1} parent=5 // pred_fallthru
      _
    %p249 = scmp.lt.s32.totalorder %s14, 2
    // Predicated region
    $region41: #{stacked_residual_forward.1} parent=5 // pred_check
      %p250 = pneg %p249
    $region42: #{stacked_residual_forward.1} parent=5 // pred_check_branch
      %252 = sbr.rel (%p250) target = $region44
    $region43: #{stacked_residual_forward.1} parent=5 // pred_region
      // Predicated region
      $region45: #{stacked_residual_forward.1} parent=43 // pred_check
        %p253 = pneg %p34
      $region46: #{stacked_residual_forward.1} parent=43 // pred_check_branch
        %255 = sbr.rel (%p253) target = $region48
      $region47: #{stacked_residual_forward.1} parent=43 // pred_region
        %p256 = scmp.lt.s32.totalorder %s14, 1
        %s257 = scalar_select %p256, %s14, 1
        %s258 = smul.addr %s257, 2
        %s259 = smul.addr %s258, 8
        %s260 = scalar_lea.vmem %s0, %s259
      $region48: #{stacked_residual_forward.1} parent=43 // pred_fallthru
        _
    $region44: #{stacked_residual_forward.1} parent=5 // pred_fallthru
      _
    %p261 = scmp.le.s32.totalorder 1, %s14
    %p262 = scmp.lt.s32.totalorder %s14, 3
    %p263 = pnand %p261, %p262
    %p264 = pneg %p263
    // Predicated region
    $region49: #{stacked_residual_forward.1} parent=5 // pred_check
      _
    $region50: #{stacked_residual_forward.1} parent=5 // pred_check_branch
      %266 = sbr.rel (%p263) target = $region52
    $region51: #{stacked_residual_forward.1} parent=5 // pred_region
      %s267 = ssub.s32 %s14, 1
      %p268 = scmp.lt.s32.totalorder %s19, 1
      %s269 = scalar_select %p268, %s19, 1
      %s270 = smul.addr %s269, 2
      %s271 = smul.addr %s270, 8
      %s272 = scalar_lea.vmem %s0, %s271
      %p273 = pneg %p40
      %p274 = pneg %p37
      %p275 = pneg %p61
      %p276 = pneg %p58
      %p277 = pneg %p82
      %p278 = pneg %p79
      %p279 = pneg %p103
      %p280 = pneg %p100
      %p281 = pneg %p124
      %p282 = pneg %p121
      %p283 = pneg %p145
      %p284 = pneg %p142
      %p285 = pneg %p166
      %p286 = pneg %p163
      %p287 = pneg %p187
      %p288 = pneg %p184
      %p289 = pneg %p213
      %p290 = pneg %p210
      %p291 = scmp.lt.s32.totalorder %s19, 1
      %s292 = scalar_select %p291, %s19, 1
      %s293 = smul.addr %s292, 2
      %s294 = smul.addr %s293, 8
      %s295 = scalar_lea.vmem %s8, %s294
      %p296 = scmp.lt.s32.totalorder %s19, 1
      %s297 = scalar_select %p296, %s19, 1
      %s298 = smul.addr %s297, 2
      %s299 = smul.addr %s298, 8
      %s300 = scalar_lea.vmem %s0, %s299
      %p301 = scmp.lt.s32.totalorder %s19, 1
      %s302 = scalar_select %p301, %s19, 1
      %s303 = smul.addr %s302, 2
      %s304 = smul.addr %s303, 8
      %s305 = scalar_lea.vmem %s8, %s304
      %v307 = vld [vmem:[%s300] sm:$0xff]
      %v308 = vld [vmem:[%s300 + $0x8] sm:$0xff]
      %v309 = vld [vmem:[%s1] sm:$0x3]
      %v310 = vpack.c.bf16 %v307, %v307
      %v311 = vpack.c.bf16 %v308, %v308
      %v312 = vld [vmem:[%s2] sm:$0xf]
      %314 = vset.pattern.permute.xlu0 0
      %315 = vperm.xlu0 %314, %v312
      %v316 = vpop.permute.xlu0 %315
      %vm318 = vcmask 64512
      %v320 = vsel %vm318, %v309, 0
      %vm322 = vcmask 1043456
      %v324 = vsel %vm322, %v310, 0
      %v327 = vsel %vm322, %v311, 0
      %329 = vmatprep.subr.bf16.mxu0 0
      %330 = vmatpush1.bf16.msra.mxu0 0
      %331 = vmatprep.subr.bf16.mxu0 0
      %332 = vmatpush1.bf16.msra.mxu0 0
      %333 = vmatprep.subr.bf16.mxu0 0
      %334 = vmatpush1.bf16.msra.mxu0 0
      %335 = vmatprep.subr.bf16.mxu0 0
      %336 = vmatpush1.bf16.msra.mxu0 0
      %337 = vmatprep.subr.bf16.mxu0 0
      %338 = vmatpush1.bf16.msra.mxu0 0
      %339 = vmatprep.subr.bf16.mxu0 0
      %340 = vmatpush1.bf16.msra.mxu0 0
      %341 = vmatprep.subr.bf16.mxu0 0
      %342 = vmatpush1.bf16.msra.mxu0 0
      %343 = vmatprep.subr.bf16.mxu0 %v327
      %344 = vmatpush1.bf16.msra.mxu0 %v324
      %345 = vmatprep.subr.bf16.mxu0 0
      %346 = vmatpush2.bf16.msra.mxu0 0
      %347 = vmatprep.subr.bf16.mxu0 0
      %348 = vmatpush2.bf16.msra.mxu0 0
      %349 = vmatprep.subr.bf16.mxu0 0
      %350 = vmatpush2.bf16.msra.mxu0 0
      %351 = vmatprep.subr.bf16.mxu0 0
      %352 = vmatpush2.bf16.msra.mxu0 0
      %353 = vmatprep.subr.bf16.mxu0 0
      %354 = vmatpush2.bf16.msra.mxu0 0
      %355 = vmatprep.subr.bf16.mxu0 0
      %356 = vmatpush2.bf16.msra.mxu0 0
      %357 = vmatprep.subr.bf16.mxu0 0
      %358 = vmatpush2.bf16.msra.mxu0 0
      %359 = vmatprep.subr.bf16.mxu0 0
      %360 = vmatpush2.bf16.msra.mxu0 0
      %361 = vmatprep.mubr.bf16.mxu0 0
      %362 = vmatmul.mubr.bf16.gmra.mxu0 %v320
      %v363 = vpop.f32.mrf.mxu0
      %v364 = vadd.f32 %v316, %v363
      %v365 = vpop.f32.mrf.mxu0
      %v366 = vadd.f32 %v316, %v365
      %v367 = vpop.f32.mrf.mxu0
      %v368 = vpop.f32.mrf.mxu0
      %369 = vdwg.mxu0
      %v370 = vmax.f32 %v364, 0.0
      %v371 = vmax.f32 %v366, 0.0
      %373 = vrot.lane.b32.xlu0 %v371, 17
      %v374 = vpop.permute.xlu0 %373
      %377 = vrot.lane.b32.xlu0 %v370, 17
      %v378 = vpop.permute.xlu0 %377
      %vm379 = vcmask 138240
      %v380 = vsel %vm379, %v378, %v374
      %v383 = vsel %vm379, %v374, %v378
      %v384 = vld [vmem:[%s7] ss:$8 sm:$0x3]
      %v386 = vlaneseq
      %v387 = vshrl.u32 %v386, 7
      %v388 = vsub.s32 0, %v387
      %v389 = vrot.slane %v384, %v388
      %v390 = vlaneseq
      %v391 = vshrl.u32 %v390, 7
      %v392 = vsub.s32 1, %v391
      %v393 = vrot.slane %v384, %v392
      %v396 = vmul.f32 %v383, %v389
      %v397 = vmul.f32 %v380, %v393
      %v398 = vld [vmem:[%s3] sm:$0x3]
      %v399 = vpack.c.bf16 %v396, %v396
      %v400 = vpack.c.bf16 %v397, %v397
      %401 = vrot.lane.b32.xlu0 %v371, 16
      %v402 = vpop.permute.xlu0 %401
      %404 = vrot.lane.b32.xlu0 %v370, 16
      %v405 = vpop.permute.xlu0 %404
      %vm406 = vcmask 130048
      %v407 = vsel %vm406, %v405, %v402
      %v410 = vsel %vm406, %v402, %v405
      %s411 = scalar_lea.vmem %s7, 1
      %v412 = vld [vmem:[%s411] ss:$8 sm:$0x3]
      %v414 = vlaneseq
      %v415 = vshrl.u32 %v414, 7
      %v416 = vsub.s32 0, %v415
      %v417 = vrot.slane %v412, %v416
      %v418 = vlaneseq
      %v419 = vshrl.u32 %v418, 7
      %v420 = vsub.s32 1, %v419
      %v421 = vrot.slane %v412, %v420
      %v424 = vmul.f32 %v410, %v417
      %v425 = vmul.f32 %v407, %v421
      %s426 = scalar_lea.vmem %s3, 2
      %v427 = vld [vmem:[%s426] sm:$0x3]
      %v428 = vpack.c.bf16 %v424, %v424
      %v429 = vpack.c.bf16 %v425, %v425
      %vm430 = vcmask 31744
      %v432 = vsel %vm430, %v427, 0
      %vm434 = vcmask 1041408
      %v436 = vsel %vm434, %v428, 0
      %v439 = vsel %vm434, %v429, 0
      %441 = vmatprep.subr.bf16.mxu0 0
      %442 = vmatpush1.bf16.msra.mxu0 0
      %443 = vmatprep.subr.bf16.mxu0 0
      %444 = vmatpush1.bf16.msra.mxu0 0
      %445 = vmatprep.subr.bf16.mxu0 0
      %446 = vmatpush1.bf16.msra.mxu0 0
      %447 = vmatprep.subr.bf16.mxu0 0
      %448 = vmatpush1.bf16.msra.mxu0 0
      %449 = vmatprep.subr.bf16.mxu0 0
      %450 = vmatpush1.bf16.msra.mxu0 0
      %451 = vmatprep.subr.bf16.mxu0 0
      %452 = vmatpush1.bf16.msra.mxu0 0
      %453 = vmatprep.subr.bf16.mxu0 0
      %454 = vmatpush1.bf16.msra.mxu0 0
      %455 = vmatprep.subr.bf16.mxu0 %v439
      %456 = vmatpush1.bf16.msra.mxu0 %v436
      %457 = vmatprep.subr.bf16.mxu0 0
      %458 = vmatpush2.bf16.msra.mxu0 0
      %459 = vmatprep.subr.bf16.mxu0 0
      %460 = vmatpush2.bf16.msra.mxu0 0
      %461 = vmatprep.subr.bf16.mxu0 0
      %462 = vmatpush2.bf16.msra.mxu0 0
      %463 = vmatprep.subr.bf16.mxu0 0
      %464 = vmatpush2.bf16.msra.mxu0 0
      %465 = vmatprep.subr.bf16.mxu0 0
      %466 = vmatpush2.bf16.msra.mxu0 0
      %467 = vmatprep.subr.bf16.mxu0 0
      %468 = vmatpush2.bf16.msra.mxu0 0
      %469 = vmatprep.subr.bf16.mxu0 0
      %470 = vmatpush2.bf16.msra.mxu0 0
      %471 = vmatprep.subr.bf16.mxu0 0
      %472 = vmatpush2.bf16.msra.mxu0 0
      %473 = vmatprep.mubr.bf16.mxu0 0
      %474 = vmatmul.mubr.bf16.gmra.mxu0 %v432
      %v475 = vpop.f32.mrf.mxu0
      %v476 = vadd.f32 0.0, %v475
      %v477 = vpop.f32.mrf.mxu0
      %v478 = vadd.f32 0.0, %v477
      %v479 = vpop.f32.mrf.mxu0
      %v480 = vpop.f32.mrf.mxu0
      %481 = vdwg.mxu0
      %v483 = vsel %vm430, %v398, 0
      %v486 = vsel %vm434, %v399, 0
      %v489 = vsel %vm434, %v400, 0
      %491 = vmatprep.subr.bf16.mxu0 0
      %492 = vmatpush1.bf16.msra.mxu0 0
      %493 = vmatprep.subr.bf16.mxu0 0
      %494 = vmatpush1.bf16.msra.mxu0 0
      %495 = vmatprep.subr.bf16.mxu0 0
      %496 = vmatpush1.bf16.msra.mxu0 0
      %497 = vmatprep.subr.bf16.mxu0 0
      %498 = vmatpush1.bf16.msra.mxu0 0
      %499 = vmatprep.subr.bf16.mxu0 0
      %500 = vmatpush1.bf16.msra.mxu0 0
      %501 = vmatprep.subr.bf16.mxu0 0
      %502 = vmatpush1.bf16.msra.mxu0 0
      %503 = vmatprep.subr.bf16.mxu0 0
      %504 = vmatpush1.bf16.msra.mxu0 0
      %505 = vmatprep.subr.bf16.mxu0 %v489
      %506 = vmatpush1.bf16.msra.mxu0 %v486
      %507 = vmatprep.subr.bf16.mxu0 0
      %508 = vmatpush2.bf16.msra.mxu0 0
      %509 = vmatprep.subr.bf16.mxu0 0
      %510 = vmatpush2.bf16.msra.mxu0 0
      %511 = vmatprep.subr.bf16.mxu0 0
      %512 = vmatpush2.bf16.msra.mxu0 0
      %513 = vmatprep.subr.bf16.mxu0 0
      %514 = vmatpush2.bf16.msra.mxu0 0
      %515 = vmatprep.subr.bf16.mxu0 0
      %516 = vmatpush2.bf16.msra.mxu0 0
      %517 = vmatprep.subr.bf16.mxu0 0
      %518 = vmatpush2.bf16.msra.mxu0 0
      %519 = vmatprep.subr.bf16.mxu0 0
      %520 = vmatpush2.bf16.msra.mxu0 0
      %521 = vmatprep.subr.bf16.mxu0 0
      %522 = vmatpush2.bf16.msra.mxu0 0
      %523 = vmatprep.mubr.bf16.mxu0 0
      %524 = vmatmul.mubr.bf16.gmra.mxu0 %v483
      %v525 = vpop.f32.mrf.mxu0
      %v526 = vadd.f32 %v476, %v525
      %v527 = vpop.f32.mrf.mxu0
      %v528 = vadd.f32 %v478, %v527
      %v529 = vpop.f32.mrf.mxu0
      %v530 = vpop.f32.mrf.mxu0
      %531 = vdwg.mxu0
      %532 = vrot.lane.b32.xlu0 %v371, 15
      %v533 = vpop.permute.xlu0 %532
      %535 = vrot.lane.b32.xlu0 %v370, 15
      %v536 = vpop.permute.xlu0 %535
      %vm537 = vcmask 121856
      %v538 = vsel %vm537, %v536, %v533
      %v541 = vsel %vm537, %v533, %v536
      %s542 = scalar_lea.vmem %s7, 2
      %v543 = vld [vmem:[%s542] ss:$8 sm:$0x3]
      %v545 = vlaneseq
      %v546 = vshrl.u32 %v545, 7
      %v547 = vsub.s32 0, %v546
      %v548 = vrot.slane %v543, %v547
      %v549 = vlaneseq
      %v550 = vshrl.u32 %v549, 7
      %v551 = vsub.s32 1, %v550
      %v552 = vrot.slane %v543, %v551
      %v555 = vmul.f32 %v541, %v548
      %v556 = vmul.f32 %v538, %v552
      %s557 = scalar_lea.vmem %s3, 4
      %v558 = vld [vmem:[%s557] sm:$0x3]
      %v559 = vpack.c.bf16 %v555, %v555
      %v560 = vpack.c.bf16 %v556, %v556
      %v562 = vsel %vm430, %v558, 0
      %v565 = vsel %vm434, %v559, 0
      %v568 = vsel %vm434, %v560, 0
      %570 = vmatprep.subr.bf16.mxu0 0
      %571 = vmatpush1.bf16.msra.mxu0 0
      %572 = vmatprep.subr.bf16.mxu0 0
      %573 = vmatpush1.bf16.msra.mxu0 0
      %574 = vmatprep.subr.bf16.mxu0 0
      %575 = vmatpush1.bf16.msra.mxu0 0
      %576 = vmatprep.subr.bf16.mxu0 0
      %577 = vmatpush1.bf16.msra.mxu0 0
      %578 = vmatprep.subr.bf16.mxu0 0
      %579 = vmatpush1.bf16.msra.mxu0 0
      %580 = vmatprep.subr.bf16.mxu0 0
      %581 = vmatpush1.bf16.msra.mxu0 0
      %582 = vmatprep.subr.bf16.mxu0 0
      %583 = vmatpush1.bf16.msra.mxu0 0
      %584 = vmatprep.subr.bf16.mxu0 %v568
      %585 = vmatpush1.bf16.msra.mxu0 %v565
      %586 = vmatprep.subr.bf16.mxu0 0
      %587 = vmatpush2.bf16.msra.mxu0 0
      %588 = vmatprep.subr.bf16.mxu0 0
      %589 = vmatpush2.bf16.msra.mxu0 0
      %590 = vmatprep.subr.bf16.mxu0 0
      %591 = vmatpush2.bf16.msra.mxu0 0
      %592 = vmatprep.subr.bf16.mxu0 0
      %593 = vmatpush2.bf16.msra.mxu0 0
      %594 = vmatprep.subr.bf16.mxu0 0
      %595 = vmatpush2.bf16.msra.mxu0 0
      %596 = vmatprep.subr.bf16.mxu0 0
      %597 = vmatpush2.bf16.msra.mxu0 0
      %598 = vmatprep.subr.bf16.mxu0 0
      %599 = vmatpush2.bf16.msra.mxu0 0
      %600 = vmatprep.subr.bf16.mxu0 0
      %601 = vmatpush2.bf16.msra.mxu0 0
      %602 = vmatprep.mubr.bf16.mxu0 0
      %603 = vmatmul.mubr.bf16.gmra.mxu0 %v562
      %v604 = vpop.f32.mrf.mxu0
      %v605 = vadd.f32 0.0, %v604
      %v606 = vpop.f32.mrf.mxu0
      %v607 = vadd.f32 0.0, %v606
      %v608 = vpop.f32.mrf.mxu0
      %v609 = vpop.f32.mrf.mxu0
      %610 = vdwg.mxu0
      %v611 = vadd.f32 %v526, %v605
      %v612 = vadd.f32 %v528, %v607
      %613 = vrot.lane.b32.xlu0 %v371, 1
      %v614 = vpop.permute.xlu0 %613
      %616 = vrot.lane.b32.xlu0 %v370, 1
      %v617 = vpop.permute.xlu0 %616
      %vm618 = vcmask 7168
      %v619 = vsel %vm618, %v617, %v614
      %v622 = vsel %vm618, %v614, %v617
      %s623 = scalar_lea.vmem %s7, 3
      %v624 = vld [vmem:[%s623] ss:$8 sm:$0x3]
      %v626 = vlaneseq
      %v627 = vshrl.u32 %v626, 7
      %v628 = vsub.s32 0, %v627
      %v629 = vrot.slane %v624, %v628
      %v630 = vlaneseq
      %v631 = vshrl.u32 %v630, 7
      %v632 = vsub.s32 1, %v631
      %v633 = vrot.slane %v624, %v632
      %v636 = vmul.f32 %v622, %v629
      %v637 = vmul.f32 %v619, %v633
      %s638 = scalar_lea.vmem %s3, 6
      %v639 = vld [vmem:[%s638] sm:$0x3]
      %v640 = vpack.c.bf16 %v636, %v636
      %v641 = vpack.c.bf16 %v637, %v637
      %v643 = vsel %vm430, %v639, 0
      %v646 = vsel %vm434, %v640, 0
      %v649 = vsel %vm434, %v641, 0
      %651 = vmatprep.subr.bf16.mxu0 0
      %652 = vmatpush1.bf16.msra.mxu0 0
      %653 = vmatprep.subr.bf16.mxu0 0
      %654 = vmatpush1.bf16.msra.mxu0 0
      %655 = vmatprep.subr.bf16.mxu0 0
      %656 = vmatpush1.bf16.msra.mxu0 0
      %657 = vmatprep.subr.bf16.mxu0 0
      %658 = vmatpush1.bf16.msra.mxu0 0
      %659 = vmatprep.subr.bf16.mxu0 0
      %660 = vmatpush1.bf16.msra.mxu0 0
      %661 = vmatprep.subr.bf16.mxu0 0
      %662 = vmatpush1.bf16.msra.mxu0 0
      %663 = vmatprep.subr.bf16.mxu0 0
      %664 = vmatpush1.bf16.msra.mxu0 0
      %665 = vmatprep.subr.bf16.mxu0 %v649
      %666 = vmatpush1.bf16.msra.mxu0 %v646
      %667 = vmatprep.subr.bf16.mxu0 0
      %668 = vmatpush2.bf16.msra.mxu0 0
      %669 = vmatprep.subr.bf16.mxu0 0
      %670 = vmatpush2.bf16.msra.mxu0 0
      %671 = vmatprep.subr.bf16.mxu0 0
      %672 = vmatpush2.bf16.msra.mxu0 0
      %673 = vmatprep.subr.bf16.mxu0 0
      %674 = vmatpush2.bf16.msra.mxu0 0
      %675 = vmatprep.subr.bf16.mxu0 0
      %676 = vmatpush2.bf16.msra.mxu0 0
      %677 = vmatprep.subr.bf16.mxu0 0
      %678 = vmatpush2.bf16.msra.mxu0 0
      %679 = vmatprep.subr.bf16.mxu0 0
      %680 = vmatpush2.bf16.msra.mxu0 0
      %681 = vmatprep.subr.bf16.mxu0 0
      %682 = vmatpush2.bf16.msra.mxu0 0
      %683 = vmatprep.mubr.bf16.mxu0 0
      %684 = vmatmul.mubr.bf16.gmra.mxu0 %v643
      %v685 = vpop.f32.mrf.mxu0
      %v686 = vadd.f32 0.0, %v685
      %v687 = vpop.f32.mrf.mxu0
      %v688 = vadd.f32 0.0, %v687
      %v689 = vpop.f32.mrf.mxu0
      %v690 = vpop.f32.mrf.mxu0
      %691 = vdwg.mxu0
      %v692 = vadd.f32 %v611, %v686
      %v693 = vadd.f32 %v612, %v688
      %s694 = scalar_lea.vmem %s3, 8
      %v695 = vld [vmem:[%s694] sm:$0x3]
      %v696 = vpack.c.bf16 %v370, %v370
      %v697 = vpack.c.bf16 %v371, %v371
      %v699 = vsel %vm430, %v695, 0
      %v702 = vsel %vm434, %v696, 0
      %v705 = vsel %vm434, %v697, 0
      %707 = vmatprep.subr.bf16.mxu0 0
      %708 = vmatpush1.bf16.msra.mxu0 0
      %709 = vmatprep.subr.bf16.mxu0 0
      %710 = vmatpush1.bf16.msra.mxu0 0
      %711 = vmatprep.subr.bf16.mxu0 0
      %712 = vmatpush1.bf16.msra.mxu0 0
      %713 = vmatprep.subr.bf16.mxu0 0
      %714 = vmatpush1.bf16.msra.mxu0 0
      %715 = vmatprep.subr.bf16.mxu0 0
      %716 = vmatpush1.bf16.msra.mxu0 0
      %717 = vmatprep.subr.bf16.mxu0 0
      %718 = vmatpush1.bf16.msra.mxu0 0
      %719 = vmatprep.subr.bf16.mxu0 0
      %720 = vmatpush1.bf16.msra.mxu0 0
      %721 = vmatprep.subr.bf16.mxu0 %v705
      %722 = vmatpush1.bf16.msra.mxu0 %v702
      %723 = vmatprep.subr.bf16.mxu0 0
      %724 = vmatpush2.bf16.msra.mxu0 0
      %725 = vmatprep.subr.bf16.mxu0 0
      %726 = vmatpush2.bf16.msra.mxu0 0
      %727 = vmatprep.subr.bf16.mxu0 0
      %728 = vmatpush2.bf16.msra.mxu0 0
      %729 = vmatprep.subr.bf16.mxu0 0
      %730 = vmatpush2.bf16.msra.mxu0 0
      %731 = vmatprep.subr.bf16.mxu0 0
      %732 = vmatpush2.bf16.msra.mxu0 0
      %733 = vmatprep.subr.bf16.mxu0 0
      %734 = vmatpush2.bf16.msra.mxu0 0
      %735 = vmatprep.subr.bf16.mxu0 0
      %736 = vmatpush2.bf16.msra.mxu0 0
      %737 = vmatprep.subr.bf16.mxu0 0
      %738 = vmatpush2.bf16.msra.mxu0 0
      %739 = vmatprep.mubr.bf16.mxu0 0
      %740 = vmatmul.mubr.bf16.gmra.mxu0 %v699
      %v741 = vpop.f32.mrf.mxu0
      %v742 = vadd.f32 0.0, %v741
      %v743 = vpop.f32.mrf.mxu0
      %v744 = vadd.f32 0.0, %v743
      %v745 = vpop.f32.mrf.mxu0
      %v746 = vpop.f32.mrf.mxu0
      %747 = vdwg.mxu0
      %v748 = vadd.f32 %v692, %v742
      %v749 = vadd.f32 %v693, %v744
      %750 = vrot.lane.b32.xlu0 %v370, 127
      %v751 = vpop.permute.xlu0 %750
      %752 = vrot.lane.b32.xlu0 %v371, 127
      %v753 = vpop.permute.xlu0 %752
      %vm754 = vcmask 1039360
      %v755 = vsel %vm754, %v751, %v753
      %v759 = vsel %vm754, %v753, %v751
      %s760 = scalar_lea.vmem %s7, 5
      %v761 = vld [vmem:[%s760] ss:$8 sm:$0x3]
      %v763 = vlaneseq
      %v764 = vshrl.u32 %v763, 7
      %v765 = vsub.s32 0, %v764
      %v766 = vrot.slane %v761, %v765
      %v767 = vlaneseq
      %v768 = vshrl.u32 %v767, 7
      %v769 = vsub.s32 1, %v768
      %v770 = vrot.slane %v761, %v769
      %v773 = vmul.f32 %v755, %v766
      %v774 = vmul.f32 %v759, %v770
      %s775 = scalar_lea.vmem %s3, 10
      %v776 = vld [vmem:[%s775] sm:$0x3]
      %v777 = vpack.c.bf16 %v773, %v773
      %v778 = vpack.c.bf16 %v774, %v774
      %v780 = vsel %vm430, %v776, 0
      %v783 = vsel %vm434, %v777, 0
      %v786 = vsel %vm434, %v778, 0
      %788 = vmatprep.subr.bf16.mxu0 0
      %789 = vmatpush1.bf16.msra.mxu0 0
      %790 = vmatprep.subr.bf16.mxu0 0
      %791 = vmatpush1.bf16.msra.mxu0 0
      %792 = vmatprep.subr.bf16.mxu0 0
      %793 = vmatpush1.bf16.msra.mxu0 0
      %794 = vmatprep.subr.bf16.mxu0 0
      %795 = vmatpush1.bf16.msra.mxu0 0
      %796 = vmatprep.subr.bf16.mxu0 0
      %797 = vmatpush1.bf16.msra.mxu0 0
      %798 = vmatprep.subr.bf16.mxu0 0
      %799 = vmatpush1.bf16.msra.mxu0 0
      %800 = vmatprep.subr.bf16.mxu0 0
      %801 = vmatpush1.bf16.msra.mxu0 0
      %802 = vmatprep.subr.bf16.mxu0 %v786
      %803 = vmatpush1.bf16.msra.mxu0 %v783
      %804 = vmatprep.subr.bf16.mxu0 0
      %805 = vmatpush2.bf16.msra.mxu0 0
      %806 = vmatprep.subr.bf16.mxu0 0
      %807 = vmatpush2.bf16.msra.mxu0 0
      %808 = vmatprep.subr.bf16.mxu0 0
      %809 = vmatpush2.bf16.msra.mxu0 0
      %810 = vmatprep.subr.bf16.mxu0 0
      %811 = vmatpush2.bf16.msra.mxu0 0
      %812 = vmatprep.subr.bf16.mxu0 0
      %813 = vmatpush2.bf16.msra.mxu0 0
      %814 = vmatprep.subr.bf16.mxu0 0
      %815 = vmatpush2.bf16.msra.mxu0 0
      %816 = vmatprep.subr.bf16.mxu0 0
      %817 = vmatpush2.bf16.msra.mxu0 0
      %818 = vmatprep.subr.bf16.mxu0 0
      %819 = vmatpush2.bf16.msra.mxu0 0
      %820 = vmatprep.mubr.bf16.mxu0 0
      %821 = vmatmul.mubr.bf16.gmra.mxu0 %v780
      %v822 = vpop.f32.mrf.mxu0
      %v823 = vadd.f32 0.0, %v822
      %v824 = vpop.f32.mrf.mxu0
      %v825 = vadd.f32 0.0, %v824
      %v826 = vpop.f32.mrf.mxu0
      %v827 = vpop.f32.mrf.mxu0
      %828 = vdwg.mxu0
      %v829 = vadd.f32 %v748, %v823
      %v830 = vadd.f32 %v749, %v825
      %831 = vrot.lane.b32.xlu0 %v370, 113
      %v832 = vpop.permute.xlu0 %831
      %833 = vrot.lane.b32.xlu0 %v371, 113
      %v834 = vpop.permute.xlu0 %833
      %vm835 = vcmask 924672
      %v836 = vsel %vm835, %v832, %v834
      %v840 = vsel %vm835, %v834, %v832
      %s841 = scalar_lea.vmem %s7, 6
      %v842 = vld [vmem:[%s841] ss:$8 sm:$0x3]
      %v844 = vlaneseq
      %v845 = vshrl.u32 %v844, 7
      %v846 = vsub.s32 0, %v845
      %v847 = vrot.slane %v842, %v846
      %v848 = vlaneseq
      %v849 = vshrl.u32 %v848, 7
      %v850 = vsub.s32 1, %v849
      %v851 = vrot.slane %v842, %v850
      %v854 = vmul.f32 %v836, %v847
      %v855 = vmul.f32 %v840, %v851
      %s856 = scalar_lea.vmem %s3, 12
      %v857 = vld [vmem:[%s856] sm:$0x3]
      %v858 = vpack.c.bf16 %v854, %v854
      %v859 = vpack.c.bf16 %v855, %v855
      %v861 = vsel %vm430, %v857, 0
      %v864 = vsel %vm434, %v858, 0
      %v867 = vsel %vm434, %v859, 0
      %869 = vmatprep.subr.bf16.mxu0 0
      %870 = vmatpush1.bf16.msra.mxu0 0
      %871 = vmatprep.subr.bf16.mxu0 0
      %872 = vmatpush1.bf16.msra.mxu0 0
      %873 = vmatprep.subr.bf16.mxu0 0
      %874 = vmatpush1.bf16.msra.mxu0 0
      %875 = vmatprep.subr.bf16.mxu0 0
      %876 = vmatpush1.bf16.msra.mxu0 0
      %877 = vmatprep.subr.bf16.mxu0 0
      %878 = vmatpush1.bf16.msra.mxu0 0
      %879 = vmatprep.subr.bf16.mxu0 0
      %880 = vmatpush1.bf16.msra.mxu0 0
      %881 = vmatprep.subr.bf16.mxu0 0
      %882 = vmatpush1.bf16.msra.mxu0 0
      %883 = vmatprep.subr.bf16.mxu0 %v867
      %884 = vmatpush1.bf16.msra.mxu0 %v864
      %885 = vmatprep.subr.bf16.mxu0 0
      %886 = vmatpush2.bf16.msra.mxu0 0
      %887 = vmatprep.subr.bf16.mxu0 0
      %888 = vmatpush2.bf16.msra.mxu0 0
      %889 = vmatprep.subr.bf16.mxu0 0
      %890 = vmatpush2.bf16.msra.mxu0 0
      %891 = vmatprep.subr.bf16.mxu0 0
      %892 = vmatpush2.bf16.msra.mxu0 0
      %893 = vmatprep.subr.bf16.mxu0 0
      %894 = vmatpush2.bf16.msra.mxu0 0
      %895 = vmatprep.subr.bf16.mxu0 0
      %896 = vmatpush2.bf16.msra.mxu0 0
      %897 = vmatprep.subr.bf16.mxu0 0
      %898 = vmatpush2.bf16.msra.mxu0 0
      %899 = vmatprep.subr.bf16.mxu0 0
      %900 = vmatpush2.bf16.msra.mxu0 0
      %901 = vmatprep.mubr.bf16.mxu0 0
      %902 = vmatmul.mubr.bf16.gmra.mxu0 %v861
      %v903 = vpop.f32.mrf.mxu0
      %v904 = vadd.f32 0.0, %v903
      %v905 = vpop.f32.mrf.mxu0
      %v906 = vadd.f32 0.0, %v905
      %v907 = vpop.f32.mrf.mxu0
      %v908 = vpop.f32.mrf.mxu0
      %909 = vdwg.mxu0
      %v910 = vadd.f32 %v829, %v904
      %v911 = vadd.f32 %v830, %v906
      %912 = vrot.lane.b32.xlu0 %v370, 112
      %v913 = vpop.permute.xlu0 %912
      %914 = vrot.lane.b32.xlu0 %v371, 112
      %v915 = vpop.permute.xlu0 %914
      %vm916 = vcmask 916480
      %v917 = vsel %vm916, %v913, %v915
      %v921 = vsel %vm916, %v915, %v913
      %s922 = scalar_lea.vmem %s7, 7
      %v923 = vld [vmem:[%s922] ss:$8 sm:$0x3]
      %v925 = vlaneseq
      %v926 = vshrl.u32 %v925, 7
      %v927 = vsub.s32 0, %v926
      %v928 = vrot.slane %v923, %v927
      %v929 = vlaneseq
      %v930 = vshrl.u32 %v929, 7
      %v931 = vsub.s32 1, %v930
      %v932 = vrot.slane %v923, %v931
      %v935 = vmul.f32 %v917, %v928
      %v936 = vmul.f32 %v921, %v932
      %s937 = scalar_lea.vmem %s3, 14
      %v938 = vld [vmem:[%s937] sm:$0x3]
      %v939 = vpack.c.bf16 %v935, %v935
      %v940 = vpack.c.bf16 %v936, %v936
      %v942 = vsel %vm430, %v938, 0
      %v945 = vsel %vm434, %v939, 0
      %v948 = vsel %vm434, %v940, 0
      %950 = vmatprep.subr.bf16.mxu0 0
      %951 = vmatpush1.bf16.msra.mxu0 0
      %952 = vmatprep.subr.bf16.mxu0 0
      %953 = vmatpush1.bf16.msra.mxu0 0
      %954 = vmatprep.subr.bf16.mxu0 0
      %955 = vmatpush1.bf16.msra.mxu0 0
      %956 = vmatprep.subr.bf16.mxu0 0
      %957 = vmatpush1.bf16.msra.mxu0 0
      %958 = vmatprep.subr.bf16.mxu0 0
      %959 = vmatpush1.bf16.msra.mxu0 0
      %960 = vmatprep.subr.bf16.mxu0 0
      %961 = vmatpush1.bf16.msra.mxu0 0
      %962 = vmatprep.subr.bf16.mxu0 0
      %963 = vmatpush1.bf16.msra.mxu0 0
      %964 = vmatprep.subr.bf16.mxu0 %v948
      %965 = vmatpush1.bf16.msra.mxu0 %v945
      %966 = vmatprep.subr.bf16.mxu0 0
      %967 = vmatpush2.bf16.msra.mxu0 0
      %968 = vmatprep.subr.bf16.mxu0 0
      %969 = vmatpush2.bf16.msra.mxu0 0
      %970 = vmatprep.subr.bf16.mxu0 0
      %971 = vmatpush2.bf16.msra.mxu0 0
      %972 = vmatprep.subr.bf16.mxu0 0
      %973 = vmatpush2.bf16.msra.mxu0 0
      %974 = vmatprep.subr.bf16.mxu0 0
      %975 = vmatpush2.bf16.msra.mxu0 0
      %976 = vmatprep.subr.bf16.mxu0 0
      %977 = vmatpush2.bf16.msra.mxu0 0
      %978 = vmatprep.subr.bf16.mxu0 0
      %979 = vmatpush2.bf16.msra.mxu0 0
      %980 = vmatprep.subr.bf16.mxu0 0
      %981 = vmatpush2.bf16.msra.mxu0 0
      %982 = vmatprep.mubr.bf16.mxu0 0
      %983 = vmatmul.mubr.bf16.gmra.mxu0 %v942
      %v984 = vpop.f32.mrf.mxu0
      %v985 = vadd.f32 0.0, %v984
      %v986 = vpop.f32.mrf.mxu0
      %v987 = vadd.f32 0.0, %v986
      %v988 = vpop.f32.mrf.mxu0
      %v989 = vpop.f32.mrf.mxu0
      %990 = vdwg.mxu0
      %v991 = vadd.f32 %v910, %v985
      %v992 = vadd.f32 %v911, %v987
      %993 = vrot.lane.b32.xlu0 %v370, 111
      %v994 = vpop.permute.xlu0 %993
      %995 = vrot.lane.b32.xlu0 %v371, 111
      %v996 = vpop.permute.xlu0 %995
      %vm997 = vcmask 908288
      %v998 = vsel %vm997, %v994, %v996
      %v1002 = vsel %vm997, %v996, %v994
      %s1003 = scalar_lea.vmem %s7, 16
      %v1004 = vld [vmem:[%s1003] ss:$8 sm:$0x3]
      %v1006 = vlaneseq
      %v1007 = vshrl.u32 %v1006, 7
      %v1008 = vsub.s32 0, %v1007
      %v1009 = vrot.slane %v1004, %v1008
      %v1010 = vlaneseq
      %v1011 = vshrl.u32 %v1010, 7
      %v1012 = vsub.s32 1, %v1011
      %v1013 = vrot.slane %v1004, %v1012
      %v1016 = vmul.f32 %v998, %v1009
      %v1017 = vmul.f32 %v1002, %v1013
      %s1018 = scalar_lea.vmem %s3, 16
      %v1019 = vld [vmem:[%s1018] sm:$0x3]
      %v1020 = vpack.c.bf16 %v1016, %v1016
      %v1021 = vpack.c.bf16 %v1017, %v1017
      %v1023 = vsel %vm430, %v1019, 0
      %v1026 = vsel %vm434, %v1020, 0
      %v1029 = vsel %vm434, %v1021, 0
      %1031 = vmatprep.subr.bf16.mxu0 0
      %1032 = vmatpush1.bf16.msra.mxu0 0
      %1033 = vmatprep.subr.bf16.mxu0 0
      %1034 = vmatpush1.bf16.msra.mxu0 0
      %1035 = vmatprep.subr.bf16.mxu0 0
      %1036 = vmatpush1.bf16.msra.mxu0 0
      %1037 = vmatprep.subr.bf16.mxu0 0
      %1038 = vmatpush1.bf16.msra.mxu0 0
      %1039 = vmatprep.subr.bf16.mxu0 0
      %1040 = vmatpush1.bf16.msra.mxu0 0
      %1041 = vmatprep.subr.bf16.mxu0 0
      %1042 = vmatpush1.bf16.msra.mxu0 0
      %1043 = vmatprep.subr.bf16.mxu0 0
      %1044 = vmatpush1.bf16.msra.mxu0 0
      %1045 = vmatprep.subr.bf16.mxu0 %v1029
      %1046 = vmatpush1.bf16.msra.mxu0 %v1026
      %1047 = vmatprep.subr.bf16.mxu0 0
      %1048 = vmatpush2.bf16.msra.mxu0 0
      %1049 = vmatprep.subr.bf16.mxu0 0
      %1050 = vmatpush2.bf16.msra.mxu0 0
      %1051 = vmatprep.subr.bf16.mxu0 0
      %1052 = vmatpush2.bf16.msra.mxu0 0
      %1053 = vmatprep.subr.bf16.mxu0 0
      %1054 = vmatpush2.bf16.msra.mxu0 0
      %1055 = vmatprep.subr.bf16.mxu0 0
      %1056 = vmatpush2.bf16.msra.mxu0 0
      %1057 = vmatprep.subr.bf16.mxu0 0
      %1058 = vmatpush2.bf16.msra.mxu0 0
      %1059 = vmatprep.subr.bf16.mxu0 0
      %1060 = vmatpush2.bf16.msra.mxu0 0
      %1061 = vmatprep.subr.bf16.mxu0 0
      %1062 = vmatpush2.bf16.msra.mxu0 0
      %1063 = vmatprep.mubr.bf16.mxu0 0
      %1064 = vmatmul.mubr.bf16.gmra.mxu0 %v1023
      %v1065 = vpop.f32.mrf.mxu0
      %v1066 = vadd.f32 0.0, %v1065
      %v1067 = vpop.f32.mrf.mxu0
      %v1068 = vadd.f32 0.0, %v1067
      %v1069 = vpop.f32.mrf.mxu0
      %v1070 = vpop.f32.mrf.mxu0
      %1071 = vdwg.mxu0
      %v1072 = vadd.f32 %v991, %v1066
      %v1073 = vadd.f32 %v992, %v1068
      %v1074 = vld [vmem:[%s4] sm:$0xf]
      %1076 = vset.pattern.permute.xlu0 0
      %1077 = vperm.xlu0 %1076, %v1074
      %v1078 = vpop.permute.xlu0 %1077
      %v1080 = vadd.f32 %v1072, %v1078
      %v1081 = vadd.f32 %v1073, %v1078
      %v1082 = vmax.f32 %v1080, 0.0
      %v1083 = vmax.f32 %v1081, 0.0
      %v1084 = vld [vmem:[%s5] sm:$0xf]
      %v1085 = vpack.c.bf16 %v1082, %v1082
      %v1086 = vpack.c.bf16 %v1083, %v1083
      %v1087 = vld [vmem:[%s6] sm:$0xff]
      %1089 = vset.pattern.permute.xlu0 0
      %1090 = vperm.xlu0 %1089, %v1087
      %v1091 = vpop.permute.xlu0 %1090
      %v1094 = vsel %vm430, %v1084, 0
      %v1097 = vsel %vm434, %v1085, 0
      %v1100 = vsel %vm434, %v1086, 0
      %1102 = vmatprep.subr.bf16.mxu0 0
      %1103 = vmatpush1.bf16.msra.mxu0 0
      %1104 = vmatprep.subr.bf16.mxu0 0
      %1105 = vmatpush1.bf16.msra.mxu0 0
      %1106 = vmatprep.subr.bf16.mxu0 0
      %1107 = vmatpush1.bf16.msra.mxu0 0
      %1108 = vmatprep.subr.bf16.mxu0 0
      %1109 = vmatpush1.bf16.msra.mxu0 0
      %1110 = vmatprep.subr.bf16.mxu0 0
      %1111 = vmatpush1.bf16.msra.mxu0 0
      %1112 = vmatprep.subr.bf16.mxu0 0
      %1113 = vmatpush1.bf16.msra.mxu0 0
      %1114 = vmatprep.subr.bf16.mxu0 0
      %1115 = vmatpush1.bf16.msra.mxu0 0
      %1116 = vmatprep.subr.bf16.mxu0 %v1100
      %1117 = vmatpush1.bf16.msra.mxu0 %v1097
      %1118 = vmatprep.subr.bf16.mxu0 0
      %1119 = vmatpush2.bf16.msra.mxu0 0
      %1120 = vmatprep.subr.bf16.mxu0 0
      %1121 = vmatpush2.bf16.msra.mxu0 0
      %1122 = vmatprep.subr.bf16.mxu0 0
      %1123 = vmatpush2.bf16.msra.mxu0 0
      %1124 = vmatprep.subr.bf16.mxu0 0
      %1125 = vmatpush2.bf16.msra.mxu0 0
      %1126 = vmatprep.subr.bf16.mxu0 0
      %1127 = vmatpush2.bf16.msra.mxu0 0
      %1128 = vmatprep.subr.bf16.mxu0 0
      %1129 = vmatpush2.bf16.msra.mxu0 0
      %1130 = vmatprep.subr.bf16.mxu0 0
      %1131 = vmatpush2.bf16.msra.mxu0 0
      %1132 = vmatprep.subr.bf16.mxu0 0
      %1133 = vmatpush2.bf16.msra.mxu0 0
      %1134 = vmatprep.mubr.bf16.mxu0 0
      %1135 = vmatmul.mubr.bf16.gmra.mxu0 %v1094
      %v1136 = vpop.f32.mrf.mxu0
      %v1137 = vadd.f32 %v1091, %v1136
      %v1138 = vpop.f32.mrf.mxu0
      %v1139 = vadd.f32 %v1091, %v1138
      %v1140 = vpop.f32.mrf.mxu0
      %v1141 = vpop.f32.mrf.mxu0
      %1142 = vdwg.mxu0
      %v1143 = vadd.f32 %v1137, %v307
      %v1144 = vadd.f32 %v1139, %v308
      %s1145 = scalar_lea.vmem %s1, 2
      %v1146 = vld [vmem:[%s1145] sm:$0x3]
      %v1147 = vpack.c.bf16 %v1143, %v1143
      %v1148 = vpack.c.bf16 %v1144, %v1144
      %s1149 = scalar_lea.vmem %s2, 4
      %v1150 = vld [vmem:[%s1149] sm:$0xf]
      %1152 = vset.pattern.permute.xlu0 0
      %1153 = vperm.xlu0 %1152, %v1150
      %v1154 = vpop.permute.xlu0 %1153
      %v1157 = vsel %vm318, %v1146, 0
      %v1160 = vsel %vm322, %v1147, 0
      %v1163 = vsel %vm322, %v1148, 0
      %1165 = vmatprep.subr.bf16.mxu0 0
      %1166 = vmatpush1.bf16.msra.mxu0 0
      %1167 = vmatprep.subr.bf16.mxu0 0
      %1168 = vmatpush1.bf16.msra.mxu0 0
      %1169 = vmatprep.subr.bf16.mxu0 0
      %1170 = vmatpush1.bf16.msra.mxu0 0
      %1171 = vmatprep.subr.bf16.mxu0 0
      %1172 = vmatpush1.bf16.msra.mxu0 0
      %1173 = vmatprep.subr.bf16.mxu0 0
      %1174 = vmatpush1.bf16.msra.mxu0 0
      %1175 = vmatprep.subr.bf16.mxu0 0
      %1176 = vmatpush1.bf16.msra.mxu0 0
      %1177 = vmatprep.subr.bf16.mxu0 0
      %1178 = vmatpush1.bf16.msra.mxu0 0
      %1179 = vmatprep.subr.bf16.mxu0 %v1163
      %1180 = vmatpush1.bf16.msra.mxu0 %v1160
      %1181 = vmatprep.subr.bf16.mxu0 0
      %1182 = vmatpush2.bf16.msra.mxu0 0
      %1183 = vmatprep.subr.bf16.mxu0 0
      %1184 = vmatpush2.bf16.msra.mxu0 0
      %1185 = vmatprep.subr.bf16.mxu0 0
      %1186 = vmatpush2.bf16.msra.mxu0 0
      %1187 = vmatprep.subr.bf16.mxu0 0
      %1188 = vmatpush2.bf16.msra.mxu0 0
      %1189 = vmatprep.subr.bf16.mxu0 0
      %1190 = vmatpush2.bf16.msra.mxu0 0
      %1191 = vmatprep.subr.bf16.mxu0 0
      %1192 = vmatpush2.bf16.msra.mxu0 0
      %1193 = vmatprep.subr.bf16.mxu0 0
      %1194 = vmatpush2.bf16.msra.mxu0 0
      %1195 = vmatprep.subr.bf16.mxu0 0
      %1196 = vmatpush2.bf16.msra.mxu0 0
      %1197 = vmatprep.mubr.bf16.mxu0 0
      %1198 = vmatmul.mubr.bf16.gmra.mxu0 %v1157
      %v1199 = vpop.f32.mrf.mxu0
      %v1200 = vadd.f32 %v1154, %v1199
      %v1201 = vpop.f32.mrf.mxu0
      %v1202 = vadd.f32 %v1154, %v1201
      %v1203 = vpop.f32.mrf.mxu0
      %v1204 = vpop.f32.mrf.mxu0
      %1205 = vdwg.mxu0
      %v1206 = vmax.f32 %v1200, 0.0
      %v1207 = vmax.f32 %v1202, 0.0
      %1209 = vrot.lane.b32.xlu0 %v1207, 17
      %v1210 = vpop.permute.xlu0 %1209
      %1213 = vrot.lane.b32.xlu0 %v1206, 17
      %v1214 = vpop.permute.xlu0 %1213
      %v1215 = vsel %vm379, %v1214, %v1210
      %v1218 = vsel %vm379, %v1210, %v1214
      %v1219 = vmul.f32 %v1218, %v389
      %v1220 = vmul.f32 %v1215, %v393
      %s1221 = scalar_lea.vmem %s3, 18
      %v1222 = vld [vmem:[%s1221] sm:$0x3]
      %v1223 = vpack.c.bf16 %v1219, %v1219
      %v1224 = vpack.c.bf16 %v1220, %v1220
      %1225 = vrot.lane.b32.xlu0 %v1207, 16
      %v1226 = vpop.permute.xlu0 %1225
      %1228 = vrot.lane.b32.xlu0 %v1206, 16
      %v1229 = vpop.permute.xlu0 %1228
      %v1230 = vsel %vm406, %v1229, %v1226
      %v1233 = vsel %vm406, %v1226, %v1229
      %v1234 = vmul.f32 %v1233, %v417
      %v1235 = vmul.f32 %v1230, %v421
      %s1236 = scalar_lea.vmem %s3, 20
      %v1237 = vld [vmem:[%s1236] sm:$0x3]
      %v1238 = vpack.c.bf16 %v1234, %v1234
      %v1239 = vpack.c.bf16 %v1235, %v1235
      %v1241 = vsel %vm430, %v1237, 0
      %v1244 = vsel %vm434, %v1238, 0
      %v1247 = vsel %vm434, %v1239, 0
      %1249 = vmatprep.subr.bf16.mxu0 0
      %1250 = vmatpush1.bf16.msra.mxu0 0
      %1251 = vmatprep.subr.bf16.mxu0 0
      %1252 = vmatpush1.bf16.msra.mxu0 0
      %1253 = vmatprep.subr.bf16.mxu0 0
      %1254 = vmatpush1.bf16.msra.mxu0 0
      %1255 = vmatprep.subr.bf16.mxu0 0
      %1256 = vmatpush1.bf16.msra.mxu0 0
      %1257 = vmatprep.subr.bf16.mxu0 0
      %1258 = vmatpush1.bf16.msra.mxu0 0
      %1259 = vmatprep.subr.bf16.mxu0 0
      %1260 = vmatpush1.bf16.msra.mxu0 0
      %1261 = vmatprep.subr.bf16.mxu0 0
      %1262 = vmatpush1.bf16.msra.mxu0 0
      %1263 = vmatprep.subr.bf16.mxu0 %v1247
      %1264 = vmatpush1.bf16.msra.mxu0 %v1244
      %1265 = vmatprep.subr.bf16.mxu0 0
      %1266 = vmatpush2.bf16.msra.mxu0 0
      %1267 = vmatprep.subr.bf16.mxu0 0
      %1268 = vmatpush2.bf16.msra.mxu0 0
      %1269 = vmatprep.subr.bf16.mxu0 0
      %1270 = vmatpush2.bf16.msra.mxu0 0
      %1271 = vmatprep.subr.bf16.mxu0 0
      %1272 = vmatpush2.bf16.msra.mxu0 0
      %1273 = vmatprep.subr.bf16.mxu0 0
      %1274 = vmatpush2.bf16.msra.mxu0 0
      %1275 = vmatprep.subr.bf16.mxu0 0
      %1276 = vmatpush2.bf16.msra.mxu0 0
      %1277 = vmatprep.subr.bf16.mxu0 0
      %1278 = vmatpush2.bf16.msra.mxu0 0
      %1279 = vmatprep.subr.bf16.mxu0 0
      %1280 = vmatpush2.bf16.msra.mxu0 0
      %1281 = vmatprep.mubr.bf16.mxu0 0
      %1282 = vmatmul.mubr.bf16.gmra.mxu0 %v1241
      %v1283 = vpop.f32.mrf.mxu0
      %v1284 = vadd.f32 0.0, %v1283
      %v1285 = vpop.f32.mrf.mxu0
      %v1286 = vadd.f32 0.0, %v1285
      %v1287 = vpop.f32.mrf.mxu0
      %v1288 = vpop.f32.mrf.mxu0
      %1289 = vdwg.mxu0
      %v1291 = vsel %vm430, %v1222, 0
      %v1294 = vsel %vm434, %v1223, 0
      %v1297 = vsel %vm434, %v1224, 0
      %1299 = vmatprep.subr.bf16.mxu0 0
      %1300 = vmatpush1.bf16.msra.mxu0 0
      %1301 = vmatprep.subr.bf16.mxu0 0
      %1302 = vmatpush1.bf16.msra.mxu0 0
      %1303 = vmatprep.subr.bf16.mxu0 0
      %1304 = vmatpush1.bf16.msra.mxu0 0
      %1305 = vmatprep.subr.bf16.mxu0 0
      %1306 = vmatpush1.bf16.msra.mxu0 0
      %1307 = vmatprep.subr.bf16.mxu0 0
      %1308 = vmatpush1.bf16.msra.mxu0 0
      %1309 = vmatprep.subr.bf16.mxu0 0
      %1310 = vmatpush1.bf16.msra.mxu0 0
      %1311 = vmatprep.subr.bf16.mxu0 0
      %1312 = vmatpush1.bf16.msra.mxu0 0
      %1313 = vmatprep.subr.bf16.mxu0 %v1297
      %1314 = vmatpush1.bf16.msra.mxu0 %v1294
      %1315 = vmatprep.subr.bf16.mxu0 0
      %1316 = vmatpush2.bf16.msra.mxu0 0
      %1317 = vmatprep.subr.bf16.mxu0 0
      %1318 = vmatpush2.bf16.msra.mxu0 0
      %1319 = vmatprep.subr.bf16.mxu0 0
      %1320 = vmatpush2.bf16.msra.mxu0 0
      %1321 = vmatprep.subr.bf16.mxu0 0
      %1322 = vmatpush2.bf16.msra.mxu0 0
      %1323 = vmatprep.subr.bf16.mxu0 0
      %1324 = vmatpush2.bf16.msra.mxu0 0
      %1325 = vmatprep.subr.bf16.mxu0 0
      %1326 = vmatpush2.bf16.msra.mxu0 0
      %1327 = vmatprep.subr.bf16.mxu0 0
      %1328 = vmatpush2.bf16.msra.mxu0 0
      %1329 = vmatprep.subr.bf16.mxu0 0
      %1330 = vmatpush2.bf16.msra.mxu0 0
      %1331 = vmatprep.mubr.bf16.mxu0 0
      %1332 = vmatmul.mubr.bf16.gmra.mxu0 %v1291
      %v1333 = vpop.f32.mrf.mxu0
      %v1334 = vadd.f32 %v1284, %v1333
      %v1335 = vpop.f32.mrf.mxu0
      %v1336 = vadd.f32 %v1286, %v1335
      %v1337 = vpop.f32.mrf.mxu0
      %v1338 = vpop.f32.mrf.mxu0
      %1339 = vdwg.mxu0
      %1340 = vrot.lane.b32.xlu0 %v1207, 15
      %v1341 = vpop.permute.xlu0 %1340
      %1343 = vrot.lane.b32.xlu0 %v1206, 15
      %v1344 = vpop.permute.xlu0 %1343
      %v1345 = vsel %vm537, %v1344, %v1341
      %v1348 = vsel %vm537, %v1341, %v1344
      %v1349 = vmul.f32 %v1348, %v548
      %v1350 = vmul.f32 %v1345, %v552
      %s1351 = scalar_lea.vmem %s3, 22
      %v1352 = vld [vmem:[%s1351] sm:$0x3]
      %v1353 = vpack.c.bf16 %v1349, %v1349
      %v1354 = vpack.c.bf16 %v1350, %v1350
      %v1356 = vsel %vm430, %v1352, 0
      %v1359 = vsel %vm434, %v1353, 0
      %v1362 = vsel %vm434, %v1354, 0
      %1364 = vmatprep.subr.bf16.mxu0 0
      %1365 = vmatpush1.bf16.msra.mxu0 0
      %1366 = vmatprep.subr.bf16.mxu0 0
      %1367 = vmatpush1.bf16.msra.mxu0 0
      %1368 = vmatprep.subr.bf16.mxu0 0
      %1369 = vmatpush1.bf16.msra.mxu0 0
      %1370 = vmatprep.subr.bf16.mxu0 0
      %1371 = vmatpush1.bf16.msra.mxu0 0
      %1372 = vmatprep.subr.bf16.mxu0 0
      %1373 = vmatpush1.bf16.msra.mxu0 0
      %1374 = vmatprep.subr.bf16.mxu0 0
      %1375 = vmatpush1.bf16.msra.mxu0 0
      %1376 = vmatprep.subr.bf16.mxu0 0
      %1377 = vmatpush1.bf16.msra.mxu0 0
      %1378 = vmatprep.subr.bf16.mxu0 %v1362
      %1379 = vmatpush1.bf16.msra.mxu0 %v1359
      %1380 = vmatprep.subr.bf16.mxu0 0
      %1381 = vmatpush2.bf16.msra.mxu0 0
      %1382 = vmatprep.subr.bf16.mxu0 0
      %1383 = vmatpush2.bf16.msra.mxu0 0
      %1384 = vmatprep.subr.bf16.mxu0 0
      %1385 = vmatpush2.bf16.msra.mxu0 0
      %1386 = vmatprep.subr.bf16.mxu0 0
      %1387 = vmatpush2.bf16.msra.mxu0 0
      %1388 = vmatprep.subr.bf16.mxu0 0
      %1389 = vmatpush2.bf16.msra.mxu0 0
      %1390 = vmatprep.subr.bf16.mxu0 0
      %1391 = vmatpush2.bf16.msra.mxu0 0
      %1392 = vmatprep.subr.bf16.mxu0 0
      %1393 = vmatpush2.bf16.msra.mxu0 0
      %1394 = vmatprep.subr.bf16.mxu0 0
      %1395 = vmatpush2.bf16.msra.mxu0 0
      %1396 = vmatprep.mubr.bf16.mxu0 0
      %1397 = vmatmul.mubr.bf16.gmra.mxu0 %v1356
      %v1398 = vpop.f32.mrf.mxu0
      %v1399 = vadd.f32 0.0, %v1398
      %v1400 = vpop.f32.mrf.mxu0
      %v1401 = vadd.f32 0.0, %v1400
      %v1402 = vpop.f32.mrf.mxu0
      %v1403 = vpop.f32.mrf.mxu0
      %1404 = vdwg.mxu0
      %v1405 = vadd.f32 %v1334, %v1399
      %v1406 = vadd.f32 %v1336, %v1401
      %1407 = vrot.lane.b32.xlu0 %v1207, 1
      %v1408 = vpop.permute.xlu0 %1407
      %1410 = vrot.lane.b32.xlu0 %v1206, 1
      %v1411 = vpop.permute.xlu0 %1410
      %v1412 = vsel %vm618, %v1411, %v1408
      %v1415 = vsel %vm618, %v1408, %v1411
      %v1416 = vmul.f32 %v1415, %v629
      %v1417 = vmul.f32 %v1412, %v633
      %s1418 = scalar_lea.vmem %s3, 24
      %v1419 = vld [vmem:[%s1418] sm:$0x3]
      %v1420 = vpack.c.bf16 %v1416, %v1416
      %v1421 = vpack.c.bf16 %v1417, %v1417
      %v1423 = vsel %vm430, %v1419, 0
      %v1426 = vsel %vm434, %v1420, 0
      %v1429 = vsel %vm434, %v1421, 0
      %1431 = vmatprep.subr.bf16.mxu0 0
      %1432 = vmatpush1.bf16.msra.mxu0 0
      %1433 = vmatprep.subr.bf16.mxu0 0
      %1434 = vmatpush1.bf16.msra.mxu0 0
      %1435 = vmatprep.subr.bf16.mxu0 0
      %1436 = vmatpush1.bf16.msra.mxu0 0
      %1437 = vmatprep.subr.bf16.mxu0 0
      %1438 = vmatpush1.bf16.msra.mxu0 0
      %1439 = vmatprep.subr.bf16.mxu0 0
      %1440 = vmatpush1.bf16.msra.mxu0 0
      %1441 = vmatprep.subr.bf16.mxu0 0
      %1442 = vmatpush1.bf16.msra.mxu0 0
      %1443 = vmatprep.subr.bf16.mxu0 0
      %1444 = vmatpush1.bf16.msra.mxu0 0
      %1445 = vmatprep.subr.bf16.mxu0 %v1429
      %1446 = vmatpush1.bf16.msra.mxu0 %v1426
      %1447 = vmatprep.subr.bf16.mxu0 0
      %1448 = vmatpush2.bf16.msra.mxu0 0
      %1449 = vmatprep.subr.bf16.mxu0 0
      %1450 = vmatpush2.bf16.msra.mxu0 0
      %1451 = vmatprep.subr.bf16.mxu0 0
      %1452 = vmatpush2.bf16.msra.mxu0 0
      %1453 = vmatprep.subr.bf16.mxu0 0
      %1454 = vmatpush2.bf16.msra.mxu0 0
      %1455 = vmatprep.subr.bf16.mxu0 0
      %1456 = vmatpush2.bf16.msra.mxu0 0
      %1457 = vmatprep.subr.bf16.mxu0 0
      %1458 = vmatpush2.bf16.msra.mxu0 0
      %1459 = vmatprep.subr.bf16.mxu0 0
      %1460 = vmatpush2.bf16.msra.mxu0 0
      %1461 = vmatprep.subr.bf16.mxu0 0
      %1462 = vmatpush2.bf16.msra.mxu0 0
      %1463 = vmatprep.mubr.bf16.mxu0 0
      %1464 = vmatmul.mubr.bf16.gmra.mxu0 %v1423
      %v1465 = vpop.f32.mrf.mxu0
      %v1466 = vadd.f32 0.0, %v1465
      %v1467 = vpop.f32.mrf.mxu0
      %v1468 = vadd.f32 0.0, %v1467
      %v1469 = vpop.f32.mrf.mxu0
      %v1470 = vpop.f32.mrf.mxu0
      %1471 = vdwg.mxu0
      %v1472 = vadd.f32 %v1405, %v1466
      %v1473 = vadd.f32 %v1406, %v1468
      %s1474 = scalar_lea.vmem %s3, 26
      %v1475 = vld [vmem:[%s1474] sm:$0x3]
      %v1476 = vpack.c.bf16 %v1206, %v1206
      %v1477 = vpack.c.bf16 %v1207, %v1207
      %v1479 = vsel %vm430, %v1475, 0
      %v1482 = vsel %vm434, %v1476, 0
      %v1485 = vsel %vm434, %v1477, 0
      %1487 = vmatprep.subr.bf16.mxu0 0
      %1488 = vmatpush1.bf16.msra.mxu0 0
      %1489 = vmatprep.subr.bf16.mxu0 0
      %1490 = vmatpush1.bf16.msra.mxu0 0
      %1491 = vmatprep.subr.bf16.mxu0 0
      %1492 = vmatpush1.bf16.msra.mxu0 0
      %1493 = vmatprep.subr.bf16.mxu0 0
      %1494 = vmatpush1.bf16.msra.mxu0 0
      %1495 = vmatprep.subr.bf16.mxu0 0
      %1496 = vmatpush1.bf16.msra.mxu0 0
      %1497 = vmatprep.subr.bf16.mxu0 0
      %1498 = vmatpush1.bf16.msra.mxu0 0
      %1499 = vmatprep.subr.bf16.mxu0 0
      %1500 = vmatpush1.bf16.msra.mxu0 0
      %1501 = vmatprep.subr.bf16.mxu0 %v1485
      %1502 = vmatpush1.bf16.msra.mxu0 %v1482
      %1503 = vmatprep.subr.bf16.mxu0 0
      %1504 = vmatpush2.bf16.msra.mxu0 0
      %1505 = vmatprep.subr.bf16.mxu0 0
      %1506 = vmatpush2.bf16.msra.mxu0 0
      %1507 = vmatprep.subr.bf16.mxu0 0
      %1508 = vmatpush2.bf16.msra.mxu0 0
      %1509 = vmatprep.subr.bf16.mxu0 0
      %1510 = vmatpush2.bf16.msra.mxu0 0
      %1511 = vmatprep.subr.bf16.mxu0 0
      %1512 = vmatpush2.bf16.msra.mxu0 0
      %1513 = vmatprep.subr.bf16.mxu0 0
      %1514 = vmatpush2.bf16.msra.mxu0 0
      %1515 = vmatprep.subr.bf16.mxu0 0
      %1516 = vmatpush2.bf16.msra.mxu0 0
      %1517 = vmatprep.subr.bf16.mxu0 0
      %1518 = vmatpush2.bf16.msra.mxu0 0
      %1519 = vmatprep.mubr.bf16.mxu0 0
      %1520 = vmatmul.mubr.bf16.gmra.mxu0 %v1479
      %v1521 = vpop.f32.mrf.mxu0
      %v1522 = vadd.f32 0.0, %v1521
      %v1523 = vpop.f32.mrf.mxu0
      %v1524 = vadd.f32 0.0, %v1523
      %v1525 = vpop.f32.mrf.mxu0
      %v1526 = vpop.f32.mrf.mxu0
      %1527 = vdwg.mxu0
      %v1528 = vadd.f32 %v1472, %v1522
      %v1529 = vadd.f32 %v1473, %v1524
      %1530 = vrot.lane.b32.xlu0 %v1206, 127
      %v1531 = vpop.permute.xlu0 %1530
      %1532 = vrot.lane.b32.xlu0 %v1207, 127
      %v1533 = vpop.permute.xlu0 %1532
      %v1534 = vsel %vm754, %v1531, %v1533
      %v1538 = vsel %vm754, %v1533, %v1531
      %v1539 = vmul.f32 %v1534, %v766
      %v1540 = vmul.f32 %v1538, %v770
      %s1541 = scalar_lea.vmem %s3, 28
      %v1542 = vld [vmem:[%s1541] sm:$0x3]
      %v1543 = vpack.c.bf16 %v1539, %v1539
      %v1544 = vpack.c.bf16 %v1540, %v1540
      %v1546 = vsel %vm430, %v1542, 0
      %v1549 = vsel %vm434, %v1543, 0
      %v1552 = vsel %vm434, %v1544, 0
      %1554 = vmatprep.subr.bf16.mxu0 0
      %1555 = vmatpush1.bf16.msra.mxu0 0
      %1556 = vmatprep.subr.bf16.mxu0 0
      %1557 = vmatpush1.bf16.msra.mxu0 0
      %1558 = vmatprep.subr.bf16.mxu0 0
      %1559 = vmatpush1.bf16.msra.mxu0 0
      %1560 = vmatprep.subr.bf16.mxu0 0
      %1561 = vmatpush1.bf16.msra.mxu0 0
      %1562 = vmatprep.subr.bf16.mxu0 0
      %1563 = vmatpush1.bf16.msra.mxu0 0
      %1564 = vmatprep.subr.bf16.mxu0 0
      %1565 = vmatpush1.bf16.msra.mxu0 0
      %1566 = vmatprep.subr.bf16.mxu0 0
      %1567 = vmatpush1.bf16.msra.mxu0 0
      %1568 = vmatprep.subr.bf16.mxu0 %v1552
      %1569 = vmatpush1.bf16.msra.mxu0 %v1549
      %1570 = vmatprep.subr.bf16.mxu0 0
      %1571 = vmatpush2.bf16.msra.mxu0 0
      %1572 = vmatprep.subr.bf16.mxu0 0
      %1573 = vmatpush2.bf16.msra.mxu0 0
      %1574 = vmatprep.subr.bf16.mxu0 0
      %1575 = vmatpush2.bf16.msra.mxu0 0
      %1576 = vmatprep.subr.bf16.mxu0 0
      %1577 = vmatpush2.bf16.msra.mxu0 0
      %1578 = vmatprep.subr.bf16.mxu0 0
      %1579 = vmatpush2.bf16.msra.mxu0 0
      %1580 = vmatprep.subr.bf16.mxu0 0
      %1581 = vmatpush2.bf16.msra.mxu0 0
      %1582 = vmatprep.subr.bf16.mxu0 0
      %1583 = vmatpush2.bf16.msra.mxu0 0
      %1584 = vmatprep.subr.bf16.mxu0 0
      %1585 = vmatpush2.bf16.msra.mxu0 0
      %1586 = vmatprep.mubr.bf16.mxu0 0
      %1587 = vmatmul.mubr.bf16.gmra.mxu0 %v1546
      %v1588 = vpop.f32.mrf.mxu0
      %v1589 = vadd.f32 0.0, %v1588
      %v1590 = vpop.f32.mrf.mxu0
      %v1591 = vadd.f32 0.0, %v1590
      %v1592 = vpop.f32.mrf.mxu0
      %v1593 = vpop.f32.mrf.mxu0
      %1594 = vdwg.mxu0
      %v1595 = vadd.f32 %v1528, %v1589
      %v1596 = vadd.f32 %v1529, %v1591
      %1597 = vrot.lane.b32.xlu0 %v1206, 113
      %v1598 = vpop.permute.xlu0 %1597
      %1599 = vrot.lane.b32.xlu0 %v1207, 113
      %v1600 = vpop.permute.xlu0 %1599
      %v1601 = vsel %vm835, %v1598, %v1600
      %v1605 = vsel %vm835, %v1600, %v1598
      %v1606 = vmul.f32 %v1601, %v847
      %v1607 = vmul.f32 %v1605, %v851
      %s1608 = scalar_lea.vmem %s3, 30
      %v1609 = vld [vmem:[%s1608] sm:$0x3]
      %v1610 = vpack.c.bf16 %v1606, %v1606
      %v1611 = vpack.c.bf16 %v1607, %v1607
      %v1613 = vsel %vm430, %v1609, 0
      %v1616 = vsel %vm434, %v1610, 0
      %v1619 = vsel %vm434, %v1611, 0
      %1621 = vmatprep.subr.bf16.mxu0 0
      %1622 = vmatpush1.bf16.msra.mxu0 0
      %1623 = vmatprep.subr.bf16.mxu0 0
      %1624 = vmatpush1.bf16.msra.mxu0 0
      %1625 = vmatprep.subr.bf16.mxu0 0
      %1626 = vmatpush1.bf16.msra.mxu0 0
      %1627 = vmatprep.subr.bf16.mxu0 0
      %1628 = vmatpush1.bf16.msra.mxu0 0
      %1629 = vmatprep.subr.bf16.mxu0 0
      %1630 = vmatpush1.bf16.msra.mxu0 0
      %1631 = vmatprep.subr.bf16.mxu0 0
      %1632 = vmatpush1.bf16.msra.mxu0 0
      %1633 = vmatprep.subr.bf16.mxu0 0
      %1634 = vmatpush1.bf16.msra.mxu0 0
      %1635 = vmatprep.subr.bf16.mxu0 %v1619
      %1636 = vmatpush1.bf16.msra.mxu0 %v1616
      %1637 = vmatprep.subr.bf16.mxu0 0
      %1638 = vmatpush2.bf16.msra.mxu0 0
      %1639 = vmatprep.subr.bf16.mxu0 0
      %1640 = vmatpush2.bf16.msra.mxu0 0
      %1641 = vmatprep.subr.bf16.mxu0 0
      %1642 = vmatpush2.bf16.msra.mxu0 0
      %1643 = vmatprep.subr.bf16.mxu0 0
      %1644 = vmatpush2.bf16.msra.mxu0 0
      %1645 = vmatprep.subr.bf16.mxu0 0
      %1646 = vmatpush2.bf16.msra.mxu0 0
      %1647 = vmatprep.subr.bf16.mxu0 0
      %1648 = vmatpush2.bf16.msra.mxu0 0
      %1649 = vmatprep.subr.bf16.mxu0 0
      %1650 = vmatpush2.bf16.msra.mxu0 0
      %1651 = vmatprep.subr.bf16.mxu0 0
      %1652 = vmatpush2.bf16.msra.mxu0 0
      %1653 = vmatprep.mubr.bf16.mxu0 0
      %1654 = vmatmul.mubr.bf16.gmra.mxu0 %v1613
      %v1655 = vpop.f32.mrf.mxu0
      %v1656 = vadd.f32 0.0, %v1655
      %v1657 = vpop.f32.mrf.mxu0
      %v1658 = vadd.f32 0.0, %v1657
      %v1659 = vpop.f32.mrf.mxu0
      %v1660 = vpop.f32.mrf.mxu0
      %1661 = vdwg.mxu0
      %v1662 = vadd.f32 %v1595, %v1656
      %v1663 = vadd.f32 %v1596, %v1658
      %1664 = vrot.lane.b32.xlu0 %v1206, 112
      %v1665 = vpop.permute.xlu0 %1664
      %1666 = vrot.lane.b32.xlu0 %v1207, 112
      %v1667 = vpop.permute.xlu0 %1666
      %v1668 = vsel %vm916, %v1665, %v1667
      %v1672 = vsel %vm916, %v1667, %v1665
      %v1673 = vmul.f32 %v1668, %v928
      %v1674 = vmul.f32 %v1672, %v932
      %s1675 = scalar_lea.vmem %s3, 32
      %v1676 = vld [vmem:[%s1675] sm:$0x3]
      %v1677 = vpack.c.bf16 %v1673, %v1673
      %v1678 = vpack.c.bf16 %v1674, %v1674
      %v1680 = vsel %vm430, %v1676, 0
      %v1683 = vsel %vm434, %v1677, 0
      %v1686 = vsel %vm434, %v1678, 0
      %1688 = vmatprep.subr.bf16.mxu0 0
      %1689 = vmatpush1.bf16.msra.mxu0 0
      %1690 = vmatprep.subr.bf16.mxu0 0
      %1691 = vmatpush1.bf16.msra.mxu0 0
      %1692 = vmatprep.subr.bf16.mxu0 0
      %1693 = vmatpush1.bf16.msra.mxu0 0
      %1694 = vmatprep.subr.bf16.mxu0 0
      %1695 = vmatpush1.bf16.msra.mxu0 0
      %1696 = vmatprep.subr.bf16.mxu0 0
      %1697 = vmatpush1.bf16.msra.mxu0 0
      %1698 = vmatprep.subr.bf16.mxu0 0
      %1699 = vmatpush1.bf16.msra.mxu0 0
      %1700 = vmatprep.subr.bf16.mxu0 0
      %1701 = vmatpush1.bf16.msra.mxu0 0
      %1702 = vmatprep.subr.bf16.mxu0 %v1686
      %1703 = vmatpush1.bf16.msra.mxu0 %v1683
      %1704 = vmatprep.subr.bf16.mxu0 0
      %1705 = vmatpush2.bf16.msra.mxu0 0
      %1706 = vmatprep.subr.bf16.mxu0 0
      %1707 = vmatpush2.bf16.msra.mxu0 0
      %1708 = vmatprep.subr.bf16.mxu0 0
      %1709 = vmatpush2.bf16.msra.mxu0 0
      %1710 = vmatprep.subr.bf16.mxu0 0
      %1711 = vmatpush2.bf16.msra.mxu0 0
      %1712 = vmatprep.subr.bf16.mxu0 0
      %1713 = vmatpush2.bf16.msra.mxu0 0
      %1714 = vmatprep.subr.bf16.mxu0 0
      %1715 = vmatpush2.bf16.msra.mxu0 0
      %1716 = vmatprep.subr.bf16.mxu0 0
      %1717 = vmatpush2.bf16.msra.mxu0 0
      %1718 = vmatprep.subr.bf16.mxu0 0
      %1719 = vmatpush2.bf16.msra.mxu0 0
      %1720 = vmatprep.mubr.bf16.mxu0 0
      %1721 = vmatmul.mubr.bf16.gmra.mxu0 %v1680
      %v1722 = vpop.f32.mrf.mxu0
      %v1723 = vadd.f32 0.0, %v1722
      %v1724 = vpop.f32.mrf.mxu0
      %v1725 = vadd.f32 0.0, %v1724
      %v1726 = vpop.f32.mrf.mxu0
      %v1727 = vpop.f32.mrf.mxu0
      %1728 = vdwg.mxu0
      %v1729 = vadd.f32 %v1662, %v1723
      %v1730 = vadd.f32 %v1663, %v1725
      %1731 = vrot.lane.b32.xlu0 %v1206, 111
      %v1732 = vpop.permute.xlu0 %1731
      %1733 = vrot.lane.b32.xlu0 %v1207, 111
      %v1734 = vpop.permute.xlu0 %1733
      %v1735 = vsel %vm997, %v1732, %v1734
      %v1739 = vsel %vm997, %v1734, %v1732
      %v1740 = vmul.f32 %v1735, %v1009
      %v1741 = vmul.f32 %v1739, %v1013
      %s1742 = scalar_lea.vmem %s3, 34
      %v1743 = vld [vmem:[%s1742] sm:$0x3]
      %v1744 = vpack.c.bf16 %v1740, %v1740
      %v1745 = vpack.c.bf16 %v1741, %v1741
      %v1747 = vsel %vm430, %v1743, 0
      %v1750 = vsel %vm434, %v1744, 0
      %v1753 = vsel %vm434, %v1745, 0
      %1755 = vmatprep.subr.bf16.mxu0 0
      %1756 = vmatpush1.bf16.msra.mxu0 0
      %1757 = vmatprep.subr.bf16.mxu0 0
      %1758 = vmatpush1.bf16.msra.mxu0 0
      %1759 = vmatprep.subr.bf16.mxu0 0
      %1760 = vmatpush1.bf16.msra.mxu0 0
      %1761 = vmatprep.subr.bf16.mxu0 0
      %1762 = vmatpush1.bf16.msra.mxu0 0
      %1763 = vmatprep.subr.bf16.mxu0 0
      %1764 = vmatpush1.bf16.msra.mxu0 0
      %1765 = vmatprep.subr.bf16.mxu0 0
      %1766 = vmatpush1.bf16.msra.mxu0 0
      %1767 = vmatprep.subr.bf16.mxu0 0
      %1768 = vmatpush1.bf16.msra.mxu0 0
      %1769 = vmatprep.subr.bf16.mxu0 %v1753
      %1770 = vmatpush1.bf16.msra.mxu0 %v1750
      %1771 = vmatprep.subr.bf16.mxu0 0
      %1772 = vmatpush2.bf16.msra.mxu0 0
      %1773 = vmatprep.subr.bf16.mxu0 0
      %1774 = vmatpush2.bf16.msra.mxu0 0
      %1775 = vmatprep.subr.bf16.mxu0 0
      %1776 = vmatpush2.bf16.msra.mxu0 0
      %1777 = vmatprep.subr.bf16.mxu0 0
      %1778 = vmatpush2.bf16.msra.mxu0 0
      %1779 = vmatprep.subr.bf16.mxu0 0
      %1780 = vmatpush2.bf16.msra.mxu0 0
      %1781 = vmatprep.subr.bf16.mxu0 0
      %1782 = vmatpush2.bf16.msra.mxu0 0
      %1783 = vmatprep.subr.bf16.mxu0 0
      %1784 = vmatpush2.bf16.msra.mxu0 0
      %1785 = vmatprep.subr.bf16.mxu0 0
      %1786 = vmatpush2.bf16.msra.mxu0 0
      %1787 = vmatprep.mubr.bf16.mxu0 0
      %1788 = vmatmul.mubr.bf16.gmra.mxu0 %v1747
      %v1789 = vpop.f32.mrf.mxu0
      %v1790 = vadd.f32 0.0, %v1789
      %v1791 = vpop.f32.mrf.mxu0
      %v1792 = vadd.f32 0.0, %v1791
      %v1793 = vpop.f32.mrf.mxu0
      %v1794 = vpop.f32.mrf.mxu0
      %1795 = vdwg.mxu0
      %v1796 = vadd.f32 %v1729, %v1790
      %v1797 = vadd.f32 %v1730, %v1792
      %s1798 = scalar_lea.vmem %s4, 4
      %v1799 = vld [vmem:[%s1798] sm:$0xf]
      %1801 = vset.pattern.permute.xlu0 0
      %1802 = vperm.xlu0 %1801, %v1799
      %v1803 = vpop.permute.xlu0 %1802
      %v1805 = vadd.f32 %v1796, %v1803
      %v1806 = vadd.f32 %v1797, %v1803
      %v1807 = vmax.f32 %v1805, 0.0
      %v1808 = vmax.f32 %v1806, 0.0
      %s1809 = scalar_lea.vmem %s5, 4
      %v1810 = vld [vmem:[%s1809] sm:$0xf]
      %v1811 = vpack.c.bf16 %v1807, %v1807
      %v1812 = vpack.c.bf16 %v1808, %v1808
      %s1813 = scalar_lea.vmem %s6, 8
      %v1814 = vld [vmem:[%s1813] sm:$0xff]
      %1816 = vset.pattern.permute.xlu0 0
      %1817 = vperm.xlu0 %1816, %v1814
      %v1818 = vpop.permute.xlu0 %1817
      %v1821 = vsel %vm430, %v1810, 0
      %v1824 = vsel %vm434, %v1811, 0
      %v1827 = vsel %vm434, %v1812, 0
      %1829 = vmatprep.subr.bf16.mxu0 0
      %1830 = vmatpush1.bf16.msra.mxu0 0
      %1831 = vmatprep.subr.bf16.mxu0 0
      %1832 = vmatpush1.bf16.msra.mxu0 0
      %1833 = vmatprep.subr.bf16.mxu0 0
      %1834 = vmatpush1.bf16.msra.mxu0 0
      %1835 = vmatprep.subr.bf16.mxu0 0
      %1836 = vmatpush1.bf16.msra.mxu0 0
      %1837 = vmatprep.subr.bf16.mxu0 0
      %1838 = vmatpush1.bf16.msra.mxu0 0
      %1839 = vmatprep.subr.bf16.mxu0 0
      %1840 = vmatpush1.bf16.msra.mxu0 0
      %1841 = vmatprep.subr.bf16.mxu0 0
      %1842 = vmatpush1.bf16.msra.mxu0 0
      %1843 = vmatprep.subr.bf16.mxu0 %v1827
      %1844 = vmatpush1.bf16.msra.mxu0 %v1824
      %1845 = vmatprep.subr.bf16.mxu0 0
      %1846 = vmatpush2.bf16.msra.mxu0 0
      %1847 = vmatprep.subr.bf16.mxu0 0
      %1848 = vmatpush2.bf16.msra.mxu0 0
      %1849 = vmatprep.subr.bf16.mxu0 0
      %1850 = vmatpush2.bf16.msra.mxu0 0
      %1851 = vmatprep.subr.bf16.mxu0 0
      %1852 = vmatpush2.bf16.msra.mxu0 0
      %1853 = vmatprep.subr.bf16.mxu0 0
      %1854 = vmatpush2.bf16.msra.mxu0 0
      %1855 = vmatprep.subr.bf16.mxu0 0
      %1856 = vmatpush2.bf16.msra.mxu0 0
      %1857 = vmatprep.subr.bf16.mxu0 0
      %1858 = vmatpush2.bf16.msra.mxu0 0
      %1859 = vmatprep.subr.bf16.mxu0 0
      %1860 = vmatpush2.bf16.msra.mxu0 0
      %1861 = vmatprep.mubr.bf16.mxu0 0
      %1862 = vmatmul.mubr.bf16.gmra.mxu0 %v1821
      %v1863 = vpop.f32.mrf.mxu0
      %v1864 = vadd.f32 %v1818, %v1863
      %v1865 = vpop.f32.mrf.mxu0
      %v1866 = vadd.f32 %v1818, %v1865
      %v1867 = vpop.f32.mrf.mxu0
      %v1868 = vpop.f32.mrf.mxu0
      %1869 = vdwg.mxu0
      %v1870 = vadd.f32 %v1864, %v1143
      %v1871 = vadd.f32 %v1866, %v1144
      %1872 = vst [vmem:[%s305] sm:$0xff] %v1870
      %1873 = vst [vmem:[%s305 + $0x8] sm:$0xff] %v1871
      %p1874 = scmp.lt.s32.totalorder %s19, 1
      %s1875 = scalar_select %p1874, %s19, 1
      %s1876 = smul.addr %s1875, 2
      %s1877 = smul.addr %s1876, 8
      %s1878 = scalar_lea.vmem %s8, %s1877
      // Predicated region
      $region53: #{stacked_residual_forward.1} parent=51 // pred_check
        %p1879 = pneg %p210
      $region54: #{stacked_residual_forward.1} parent=51 // pred_check_branch
        %1881 = sbr.rel (%p1879) target = $region56
      $region55: #{stacked_residual_forward.1} parent=51 // pred_region
        _
      $region56: #{stacked_residual_forward.1} parent=51 // pred_fallthru
        _
    $region52: #{stacked_residual_forward.1} parent=5 // pred_fallthru
      _
    %p1882 = scmp.le.s32.totalorder 2, %s14
    // Predicated region
    $region57: #{stacked_residual_forward.1} parent=5 // pred_check
      %p1883 = pneg %p1882
    $region58: #{stacked_residual_forward.1} parent=5 // pred_check_branch
      %1885 = sbr.rel (%p1883) target = $region60
    $region59: #{stacked_residual_forward.1} parent=5 // pred_region
      %s1886 = ssub.s32 %s14, 2
      // Predicated region
      $region61: #{stacked_residual_forward.1} parent=59 // pred_check
        %p1887 = pneg %p216
      $region62: #{stacked_residual_forward.1} parent=59 // pred_check_branch
        %1889 = sbr.rel (%p1887) target = $region64
      $region63: #{stacked_residual_forward.1} parent=59 // pred_region
        %p1890 = scmp.lt.s32.totalorder %s20, 1
        %s1891 = scalar_select %p1890, %s20, 1
        %s1892 = smul.addr %s1891, 2
        %s1893 = smul.addr %s1892, 8
        %s1894 = scalar_lea.vmem %s8, %s1893
      $region64: #{stacked_residual_forward.1} parent=59 // pred_fallthru
        _
    $region60: #{stacked_residual_forward.1} parent=5 // pred_fallthru
      _
  $region6: #{stacked_residual_forward.1} parent=0 // loop_footer
    %s18 = sadd.s32 1, %s14
  $region7: #{stacked_residual_forward.1} parent=0 // loop_footer_branch
    %13 = sbr.rel target = $region3
  $region8: #{stacked_residual_forward.1} parent=0 // loop_exit
    _

</llo_original>
